<compile_context>
chip_gen: v6e
topology: v6e:2x2x1
jax: 0.10.0
libtpu: 0.0.40
codegen_flags: <defaults>
</compile_context>

<pallas_src>
import functools
import math

import jax
import jax.numpy as jnp
from jax.experimental import pallas as pl
from jax.experimental.pallas import tpu as pltpu

_DEFAULT = jax.lax.Precision.DEFAULT
_HIGHEST = jax.lax.Precision.HIGHEST


def _vmem_limit_bytes():
    """~75% of this generation's physical VMEM (v5e/v6e: 128MiB -> 96MiB, v7x: 64MiB -> 48MiB)."""
    cap = None
    try:
        info = pltpu.get_tpu_info()
        for name in ("vmem_capacity_bytes", "vmem_size_bytes", "vmem_bytes"):
            cap = getattr(info, name, None)
            if cap:
                break
    except Exception:
        cap = None
    if not cap:
        cap = 64 * 1024 * 1024           # conservative fallback (v7x-sized)
    return int(min(cap * 3 // 4, 112 * 1024 * 1024))


# ---------------------------------------------------------------------------
# Fused kernel: one grid step == one batch element, all heads + both dense
# projections + residual + LayerNorm computed on VMEM-resident tiles.
# ---------------------------------------------------------------------------
def _cross_attention_kernel(x_ref, mask_ref, wqkv_ref, bqkv_ref, wo_ref, bo_ref,
                            lnw_ref, lnb_ref, o_ref, *, num_heads, scale, eps, precision):
    x = x_ref[...].astype(jnp.float32)                    # (S, H)   this batch element
    mask = mask_ref[...].astype(jnp.float32)              # (1, S)   additive mask, broadcast over rows
    wqkv = wqkv_ref[...].astype(jnp.float32)              # (H, 3H)  grid-invariant
    bqkv = bqkv_ref[...].astype(jnp.float32)              # (1, 3H)
    wo = wo_ref[...].astype(jnp.float32)                  # (H, H)
    bo = bo_ref[...].astype(jnp.float32)                  # (1, H)
    lnw = lnw_ref[...].astype(jnp.float32)                # (1, H)
    lnb = lnb_ref[...].astype(jnp.float32)                # (1, H)

    S, H = x.shape
    d = H // num_heads
    approx_recip = precision != _HIGHEST

    # Fused Q/K/V projection: one (S,H) x (H,3H) matmul.
    qkv = jnp.dot(x, wqkv, precision=precision, preferred_element_type=jnp.float32) + bqkv
    q = qkv[:, 0 * H:1 * H]
    k = qkv[:, 1 * H:2 * H]
    v = qkv[:, 2 * H:3 * H]

    # Per-head attention, statically unrolled; heads live along the lane axis of the (S, H)
    # tiles so no HBM (or VMEM relayout) transpose of q/k/v is needed.
    ctx_heads = []
    for h in range(num_heads):
        sl = slice(h * d, (h + 1) * d)
        qh, kh, vh = q[:, sl], k[:, sl], v[:, sl]
        scores = jax.lax.dot_general(                      # q_h @ k_h^T without materializing k^T
            qh, kh, (((1,), (1,)), ((), ())),
            precision=precision, preferred_element_type=jnp.float32)       # (S, S)
        scores = scores * scale + mask
        scores = scores - jnp.max(scores, axis=-1, keepdims=True)
        p = jnp.exp(scores)
        denom = jnp.sum(p, axis=-1, keepdims=True)
        p = p * pl.reciprocal(denom, approx=approx_recip)   # reciprocal on the EUP slot
        ctx_heads.append(jnp.dot(p, vh, precision=precision,
                                 preferred_element_type=jnp.float32))      # (S, d)
    ctx = jnp.concatenate(ctx_heads, axis=-1)               # (S, H) == permute+merge of heads

    # Output projection + residual add + TF-style LayerNorm (eps inside sqrt), fused.
    dense = jnp.dot(ctx, wo, precision=precision, preferred_element_type=jnp.float32) + bo
    y = dense + x
    u = jnp.mean(y, axis=-1, keepdims=True)
    yc = y - u
    var = jnp.mean(yc * yc, axis=-1, keepdims=True)
    y = yc * jax.lax.rsqrt(var + eps)
    o_ref[...] = (lnw * y + lnb).astype(o_ref.dtype)


# ---------------------------------------------------------------------------
# Parameter pre-fusion (done ONCE, outside the forward) and forward wrapper
# ---------------------------------------------------------------------------
def prepare_params(params):
    """Fuse Wq/Wk/Wv (and biases) and reshape 1-D params to (1, H) rows, once at init."""
    wqkv = jnp.concatenate([params["wq"], params["wk"], params["wv"]], axis=1)      # (H, 3H)
    bqkv = jnp.concatenate([params["bq"], params["bk"], params["bv"]], axis=0)      # (3H,)
    hidden = params["wo"].shape[0]
    return {
        "wqkv": wqkv,
        "bqkv": bqkv.reshape(1, 3 * hidden),
        "wo": params["wo"],
        "bo": params["bo"].reshape(1, hidden),
        "ln_w": params["ln_w"].reshape(1, hidden),
        "ln_b": params["ln_b"].reshape(1, hidden),
    }


def cross_attention_forward(x, attention_mask, fused_params, num_heads, precision=_DEFAULT):
    """x: (B, S, H); attention_mask: (B, 1, 1, S) additive float mask (0 keep, -1e4 drop)."""
    B, S, H = x.shape
    assert H % num_heads == 0
    d = H // num_heads
    assert attention_mask.shape == (B, 1, 1, S)

    mask3 = attention_mask.reshape(B, 1, S).astype(jnp.float32)   # metadata-only reshape

    kernel = functools.partial(
        _cross_attention_kernel,
        num_heads=num_heads,
        scale=1.0 / math.sqrt(d),
        eps=1e-12,
        precision=precision,
    )

    inv2d = lambda b: (0, 0)   # grid-invariant 2-D params: fetched once, VMEM-resident

    return pl.pallas_call(
        kernel,
        out_shape=jax.ShapeDtypeStruct((B, S, H), x.dtype),
        grid_spec=pltpu.PrefetchScalarGridSpec(
            num_scalar_prefetch=0,
            grid=(B,),
            in_specs=[
                pl.BlockSpec((None, S, H), lambda b: (b, 0, 0)),      # x        (per-batch tile)
                pl.BlockSpec((None, 1, S), lambda b: (b, 0, 0)),      # mask     (per-batch row)
                pl.BlockSpec((H, 3 * H), inv2d),                       # Wqkv
                pl.BlockSpec((1, 3 * H), inv2d),                       # bqkv
                pl.BlockSpec((H, H), inv2d),                           # Wo
                pl.BlockSpec((1, H), inv2d),                           # bo
                pl.BlockSpec((1, H), inv2d),                           # ln gamma
                pl.BlockSpec((1, H), inv2d),                           # ln beta
            ],
            out_specs=pl.BlockSpec((None, S, H), lambda b: (b, 0, 0)),
        ),
        compiler_params=pltpu.CompilerParams(
            dimension_semantics=("parallel",),
            vmem_limit_bytes=_vmem_limit_bytes(),
        ),
    )(x, mask3, fused_params["wqkv"], fused_params["bqkv"],
      fused_params["wo"], fused_params["bo"],
      fused_params["ln_w"], fused_params["ln_b"])


# ---------------------------------------------------------------------------
# Pure-JAX reference (mirrors the PyTorch module math exactly, f32 HIGHEST)
# ---------------------------------------------------------------------------
def cross_attention_reference(x, attention_mask, params, num_heads):
    B, S, H = x.shape
    d = H // num_heads

    def lin(t, w, b):
        return jnp.dot(t, w, precision=_HIGHEST) + b

    q = lin(x, params["wq"], params["bq"])
    k = lin(x, params["wk"], params["bk"])
    v = lin(x, params["wv"], params["bv"])

    def to_heads(t):
        return t.reshape(B, S, num_heads, d).transpose(0, 2, 1, 3)

    qh, kh, vh = to_heads(q), to_heads(k), to_heads(v)
    scores = jnp.einsum("bhqd,bhkd->bhqk", qh, kh, precision=_HIGHEST) / math.sqrt(d)
    scores = scores + attention_mask.astype(jnp.float32)
    probs = jax.nn.softmax(scores, axis=-1)
    ctx = jnp.einsum("bhqk,bhkd->bhqd", probs, vh, precision=_HIGHEST)
    ctx = ctx.transpose(0, 2, 1, 3).reshape(B, S, H)

    dense = jnp.dot(ctx, params["wo"], precision=_HIGHEST) + params["bo"]
    y = dense + x
    u = jnp.mean(y, axis=-1, keepdims=True)
    s = jnp.mean((y - u) ** 2, axis=-1, keepdims=True)
    y = (y - u) / jnp.sqrt(s + 1e-12)
    return params["ln_w"] * y + params["ln_b"]


if __name__ == "__main__":
    key = jax.random.PRNGKey(0)
    batch, seq, hidden, num_heads = 2, 8, 32, 4

    keys = jax.random.split(key, 10)
    x = jax.random.normal(keys[0], (batch, seq, hidden), dtype=jnp.float32)

    w_scale = 0.05
    params = {
        "wq": w_scale * jax.random.normal(keys[1], (hidden, hidden), jnp.float32),
        "bq": w_scale * jax.random.normal(keys[2], (hidden,), jnp.float32),
        "wk": w_scale * jax.random.normal(keys[3], (hidden, hidden), jnp.float32),
        "bk": w_scale * jax.random.normal(keys[4], (hidden,), jnp.float32),
        "wv": w_scale * jax.random.normal(keys[5], (hidden, hidden), jnp.float32),
        "bv": w_scale * jax.random.normal(keys[6], (hidden,), jnp.float32),
        "wo": w_scale * jax.random.normal(keys[7], (hidden, hidden), jnp.float32),
        "bo": w_scale * jax.random.normal(keys[8], (hidden,), jnp.float32),
        "ln_w": jnp.ones((hidden,), jnp.float32),   # nn.Parameter(torch.ones(hidden))
        "ln_b": jnp.zeros((hidden,), jnp.float32),  # nn.Parameter(torch.zeros(hidden))
    }
    fused_params = prepare_params(params)           # Wq/Wk/Wv concat hoisted out of the forward

    # Standard BERT-style additive mask: 0 = attend, -10000 = masked out.
    attention_mask = jnp.zeros((batch, 1, 1, seq), dtype=jnp.float32)
    attention_mask = attention_mask.at[1, :, :, seq - 2:].set(-10000.0)

    ref = cross_attention_reference(x, attention_mask, params, num_heads)

    # Production/fast path: single-pass MXU precision (accuracy traded per review guidance).
    out_fast = cross_attention_forward(x, attention_mask, fused_params, num_heads,
                                       precision=_DEFAULT)
    out_fast = jax.block_until_ready(out_fast)
    assert out_fast.shape == (batch, seq, hidden)
    assert jnp.allclose(out_fast, ref, atol=2e-2, rtol=2e-2), "fast-path mismatch vs reference"

    # Exact path: same fused kernel with HIGHEST precision, verifies the math tightly.
    out_exact = cross_attention_forward(x, attention_mask, fused_params, num_heads,
                                        precision=_HIGHEST)
    out_exact = jax.block_until_ready(out_exact)
    assert jnp.allclose(out_exact, ref, atol=1e-4, rtol=1e-4), "exact-path mismatch vs reference"

    print("KERNEL_OK")
</pallas_src>

<mosaic_0001>
module attributes {stable_mosaic.version = 11 : i64} {
  func.func @_cross_attention_kernel(%arg0: i32, %arg1: memref<1x8x32xf32, #tpu.memory_space<vmem>>, %arg2: memref<1x1x8xf32, #tpu.memory_space<vmem>>, %arg3: memref<32x96xf32, #tpu.memory_space<vmem>>, %arg4: memref<1x96xf32, #tpu.memory_space<vmem>>, %arg5: memref<32x32xf32, #tpu.memory_space<vmem>>, %arg6: memref<1x32xf32, #tpu.memory_space<vmem>>, %arg7: memref<1x32xf32, #tpu.memory_space<vmem>>, %arg8: memref<1x32xf32, #tpu.memory_space<vmem>>, %arg9: memref<1x8x32xf32, #tpu.memory_space<vmem>>) attributes {dimension_semantics = [#tpu.dimension_semantics<parallel>], iteration_bounds = array<i64: 2>, scalar_prefetch = 0 : i64, scratch_operands = 0 : i64, tpu.core_type = #tpu.core_type<tc>, window_params = [{transform_indices = @transform_0, window_bounds = array<i64: 1, 8, 32>}, {transform_indices = @transform_1, window_bounds = array<i64: 1, 1, 8>}, {pipeline_mode = #tpu.pipeline_mode<synchronous>, transform_indices = @transform_2, window_bounds = array<i64: 32, 96>}, {pipeline_mode = #tpu.pipeline_mode<synchronous>, transform_indices = @transform_3, window_bounds = array<i64: 1, 96>}, {pipeline_mode = #tpu.pipeline_mode<synchronous>, transform_indices = @transform_4, window_bounds = array<i64: 32, 32>}, {pipeline_mode = #tpu.pipeline_mode<synchronous>, transform_indices = @transform_5, window_bounds = array<i64: 1, 32>}, {pipeline_mode = #tpu.pipeline_mode<synchronous>, transform_indices = @transform_6, window_bounds = array<i64: 1, 32>}, {pipeline_mode = #tpu.pipeline_mode<synchronous>, transform_indices = @transform_7, window_bounds = array<i64: 1, 32>}, {transform_indices = @transform_8, window_bounds = array<i64: 1, 8, 32>}]} {
    %c0 = arith.constant 0 : index
    %c0_0 = arith.constant 0 : index
    %c0_1 = arith.constant 0 : index
    %0 = vector.load %arg1[%c0, %c0_0, %c0_1] : memref<1x8x32xf32, #tpu.memory_space<vmem>>, vector<1x8x32xf32>
    %1 = vector.shape_cast %0 : vector<1x8x32xf32> to vector<8x32xf32>
    %c0_2 = arith.constant 0 : index
    %c0_3 = arith.constant 0 : index
    %c0_4 = arith.constant 0 : index
    %2 = vector.load %arg2[%c0_2, %c0_3, %c0_4] : memref<1x1x8xf32, #tpu.memory_space<vmem>>, vector<1x1x8xf32>
    %3 = vector.shape_cast %2 : vector<1x1x8xf32> to vector<1x8xf32>
    %c0_5 = arith.constant 0 : index
    %c0_6 = arith.constant 0 : index
    %4 = vector.load %arg3[%c0_5, %c0_6] : memref<32x96xf32, #tpu.memory_space<vmem>>, vector<32x96xf32>
    %c0_7 = arith.constant 0 : index
    %c0_8 = arith.constant 0 : index
    %5 = vector.load %arg4[%c0_7, %c0_8] : memref<1x96xf32, #tpu.memory_space<vmem>>, vector<1x96xf32>
    %c0_9 = arith.constant 0 : index
    %c0_10 = arith.constant 0 : index
    %6 = vector.load %arg5[%c0_9, %c0_10] : memref<32x32xf32, #tpu.memory_space<vmem>>, vector<32x32xf32>
    %c0_11 = arith.constant 0 : index
    %c0_12 = arith.constant 0 : index
    %7 = vector.load %arg6[%c0_11, %c0_12] : memref<1x32xf32, #tpu.memory_space<vmem>>, vector<1x32xf32>
    %c0_13 = arith.constant 0 : index
    %c0_14 = arith.constant 0 : index
    %8 = vector.load %arg7[%c0_13, %c0_14] : memref<1x32xf32, #tpu.memory_space<vmem>>, vector<1x32xf32>
    %c0_15 = arith.constant 0 : index
    %c0_16 = arith.constant 0 : index
    %9 = vector.load %arg8[%c0_15, %c0_16] : memref<1x32xf32, #tpu.memory_space<vmem>>, vector<1x32xf32>
    %cst = arith.constant dense<0.000000e+00> : vector<8x96xf32>
    %10 = tpu.matmul %1, %4, %cst {dimension_numbers = #tpu.dot_dimension_numbers<[1], [0], [0], [1], [0, 0, 1, 1], [], []>} : vector<8x32xf32>, vector<32x96xf32>, vector<8x96xf32> -> vector<8x96xf32>
    %11 = vector.broadcast %5 : vector<1x96xf32> to vector<8x96xf32>
    %12 = arith.addf %10, %11 : vector<8x96xf32>
    %13 = vector.extract_strided_slice %12 {offsets = [0, 0], sizes = [8, 32], strides = [1, 1]} : vector<8x96xf32> to vector<8x32xf32>
    %14 = vector.extract_strided_slice %12 {offsets = [0, 32], sizes = [8, 32], strides = [1, 1]} : vector<8x96xf32> to vector<8x32xf32>
    %15 = vector.extract_strided_slice %12 {offsets = [0, 64], sizes = [8, 32], strides = [1, 1]} : vector<8x96xf32> to vector<8x32xf32>
    %16 = vector.extract_strided_slice %13 {offsets = [0, 0], sizes = [8, 8], strides = [1, 1]} : vector<8x32xf32> to vector<8x8xf32>
    %17 = vector.extract_strided_slice %14 {offsets = [0, 0], sizes = [8, 8], strides = [1, 1]} : vector<8x32xf32> to vector<8x8xf32>
    %18 = vector.extract_strided_slice %15 {offsets = [0, 0], sizes = [8, 8], strides = [1, 1]} : vector<8x32xf32> to vector<8x8xf32>
    %cst_17 = arith.constant dense<0.000000e+00> : vector<8x8xf32>
    %19 = tpu.matmul %16, %17, %cst_17 {dimension_numbers = #tpu.dot_dimension_numbers<[1], [1], [0], [0], [0, 0, 1, 0], [], []>} : vector<8x8xf32>, vector<8x8xf32>, vector<8x8xf32> -> vector<8x8xf32>
    %cst_18 = arith.constant 0.353553385 : f32
    %20 = vector.broadcast %cst_18 : f32 to vector<8x8xf32>
    %21 = arith.mulf %19, %20 : vector<8x8xf32>
    %22 = vector.broadcast %3 : vector<1x8xf32> to vector<8x8xf32>
    %23 = arith.addf %21, %22 : vector<8x8xf32>
    %cst_19 = arith.constant dense<0xFF800000> : vector<8xf32>
    %24 = vector.multi_reduction <maximumf>, %23, %cst_19 [1] : vector<8x8xf32> to vector<8xf32>
    %25 = vector.shape_cast %24 : vector<8xf32> to vector<8x1xf32>
    %26 = vector.broadcast %25 : vector<8x1xf32> to vector<8x8xf32>
    %27 = arith.subf %23, %26 : vector<8x8xf32>
    %28 = math.exp %27 : vector<8x8xf32>
    %cst_20 = arith.constant dense<0.000000e+00> : vector<8xf32>
    %29 = vector.multi_reduction <add>, %28, %cst_20 [1] : vector<8x8xf32> to vector<8xf32>
    %30 = vector.shape_cast %29 : vector<8xf32> to vector<8x1xf32>
    %31 = tpu.reciprocal %30 {approx = true} : vector<8x1xf32> -> vector<8x1xf32>
    %32 = vector.broadcast %31 : vector<8x1xf32> to vector<8x8xf32>
    %33 = arith.mulf %28, %32 : vector<8x8xf32>
    %cst_21 = arith.constant dense<0.000000e+00> : vector<8x8xf32>
    %34 = tpu.matmul %33, %18, %cst_21 {dimension_numbers = #tpu.dot_dimension_numbers<[1], [0], [0], [1], [0, 0, 1, 1], [], []>} : vector<8x8xf32>, vector<8x8xf32>, vector<8x8xf32> -> vector<8x8xf32>
    %35 = vector.extract_strided_slice %13 {offsets = [0, 8], sizes = [8, 8], strides = [1, 1]} : vector<8x32xf32> to vector<8x8xf32>
    %36 = vector.extract_strided_slice %14 {offsets = [0, 8], sizes = [8, 8], strides = [1, 1]} : vector<8x32xf32> to vector<8x8xf32>
    %37 = vector.extract_strided_slice %15 {offsets = [0, 8], sizes = [8, 8], strides = [1, 1]} : vector<8x32xf32> to vector<8x8xf32>
    %cst_22 = arith.constant dense<0.000000e+00> : vector<8x8xf32>
    %38 = tpu.matmul %35, %36, %cst_22 {dimension_numbers = #tpu.dot_dimension_numbers<[1], [1], [0], [0], [0, 0, 1, 0], [], []>} : vector<8x8xf32>, vector<8x8xf32>, vector<8x8xf32> -> vector<8x8xf32>
    %cst_23 = arith.constant 0.353553385 : f32
    %39 = vector.broadcast %cst_23 : f32 to vector<8x8xf32>
    %40 = arith.mulf %38, %39 : vector<8x8xf32>
    %41 = vector.broadcast %3 : vector<1x8xf32> to vector<8x8xf32>
    %42 = arith.addf %40, %41 : vector<8x8xf32>
    %cst_24 = arith.constant dense<0xFF800000> : vector<8xf32>
    %43 = vector.multi_reduction <maximumf>, %42, %cst_24 [1] : vector<8x8xf32> to vector<8xf32>
    %44 = vector.shape_cast %43 : vector<8xf32> to vector<8x1xf32>
    %45 = vector.broadcast %44 : vector<8x1xf32> to vector<8x8xf32>
    %46 = arith.subf %42, %45 : vector<8x8xf32>
    %47 = math.exp %46 : vector<8x8xf32>
    %cst_25 = arith.constant dense<0.000000e+00> : vector<8xf32>
    %48 = vector.multi_reduction <add>, %47, %cst_25 [1] : vector<8x8xf32> to vector<8xf32>
    %49 = vector.shape_cast %48 : vector<8xf32> to vector<8x1xf32>
    %50 = tpu.reciprocal %49 {approx = true} : vector<8x1xf32> -> vector<8x1xf32>
    %51 = vector.broadcast %50 : vector<8x1xf32> to vector<8x8xf32>
    %52 = arith.mulf %47, %51 : vector<8x8xf32>
    %cst_26 = arith.constant dense<0.000000e+00> : vector<8x8xf32>
    %53 = tpu.matmul %52, %37, %cst_26 {dimension_numbers = #tpu.dot_dimension_numbers<[1], [0], [0], [1], [0, 0, 1, 1], [], []>} : vector<8x8xf32>, vector<8x8xf32>, vector<8x8xf32> -> vector<8x8xf32>
    %54 = vector.extract_strided_slice %13 {offsets = [0, 16], sizes = [8, 8], strides = [1, 1]} : vector<8x32xf32> to vector<8x8xf32>
    %55 = vector.extract_strided_slice %14 {offsets = [0, 16], sizes = [8, 8], strides = [1, 1]} : vector<8x32xf32> to vector<8x8xf32>
    %56 = vector.extract_strided_slice %15 {offsets = [0, 16], sizes = [8, 8], strides = [1, 1]} : vector<8x32xf32> to vector<8x8xf32>
    %cst_27 = arith.constant dense<0.000000e+00> : vector<8x8xf32>
    %57 = tpu.matmul %54, %55, %cst_27 {dimension_numbers = #tpu.dot_dimension_numbers<[1], [1], [0], [0], [0, 0, 1, 0], [], []>} : vector<8x8xf32>, vector<8x8xf32>, vector<8x8xf32> -> vector<8x8xf32>
    %cst_28 = arith.constant 0.353553385 : f32
    %58 = vector.broadcast %cst_28 : f32 to vector<8x8xf32>
    %59 = arith.mulf %57, %58 : vector<8x8xf32>
    %60 = vector.broadcast %3 : vector<1x8xf32> to vector<8x8xf32>
    %61 = arith.addf %59, %60 : vector<8x8xf32>
    %cst_29 = arith.constant dense<0xFF800000> : vector<8xf32>
    %62 = vector.multi_reduction <maximumf>, %61, %cst_29 [1] : vector<8x8xf32> to vector<8xf32>
    %63 = vector.shape_cast %62 : vector<8xf32> to vector<8x1xf32>
    %64 = vector.broadcast %63 : vector<8x1xf32> to vector<8x8xf32>
    %65 = arith.subf %61, %64 : vector<8x8xf32>
    %66 = math.exp %65 : vector<8x8xf32>
    %cst_30 = arith.constant dense<0.000000e+00> : vector<8xf32>
    %67 = vector.multi_reduction <add>, %66, %cst_30 [1] : vector<8x8xf32> to vector<8xf32>
    %68 = vector.shape_cast %67 : vector<8xf32> to vector<8x1xf32>
    %69 = tpu.reciprocal %68 {approx = true} : vector<8x1xf32> -> vector<8x1xf32>
    %70 = vector.broadcast %69 : vector<8x1xf32> to vector<8x8xf32>
    %71 = arith.mulf %66, %70 : vector<8x8xf32>
    %cst_31 = arith.constant dense<0.000000e+00> : vector<8x8xf32>
    %72 = tpu.matmul %71, %56, %cst_31 {dimension_numbers = #tpu.dot_dimension_numbers<[1], [0], [0], [1], [0, 0, 1, 1], [], []>} : vector<8x8xf32>, vector<8x8xf32>, vector<8x8xf32> -> vector<8x8xf32>
    %73 = vector.extract_strided_slice %13 {offsets = [0, 24], sizes = [8, 8], strides = [1, 1]} : vector<8x32xf32> to vector<8x8xf32>
    %74 = vector.extract_strided_slice %14 {offsets = [0, 24], sizes = [8, 8], strides = [1, 1]} : vector<8x32xf32> to vector<8x8xf32>
    %75 = vector.extract_strided_slice %15 {offsets = [0, 24], sizes = [8, 8], strides = [1, 1]} : vector<8x32xf32> to vector<8x8xf32>
    %cst_32 = arith.constant dense<0.000000e+00> : vector<8x8xf32>
    %76 = tpu.matmul %73, %74, %cst_32 {dimension_numbers = #tpu.dot_dimension_numbers<[1], [1], [0], [0], [0, 0, 1, 0], [], []>} : vector<8x8xf32>, vector<8x8xf32>, vector<8x8xf32> -> vector<8x8xf32>
    %cst_33 = arith.constant 0.353553385 : f32
    %77 = vector.broadcast %cst_33 : f32 to vector<8x8xf32>
    %78 = arith.mulf %76, %77 : vector<8x8xf32>
    %79 = vector.broadcast %3 : vector<1x8xf32> to vector<8x8xf32>
    %80 = arith.addf %78, %79 : vector<8x8xf32>
    %cst_34 = arith.constant dense<0xFF800000> : vector<8xf32>
    %81 = vector.multi_reduction <maximumf>, %80, %cst_34 [1] : vector<8x8xf32> to vector<8xf32>
    %82 = vector.shape_cast %81 : vector<8xf32> to vector<8x1xf32>
    %83 = vector.broadcast %82 : vector<8x1xf32> to vector<8x8xf32>
    %84 = arith.subf %80, %83 : vector<8x8xf32>
    %85 = math.exp %84 : vector<8x8xf32>
    %cst_35 = arith.constant dense<0.000000e+00> : vector<8xf32>
    %86 = vector.multi_reduction <add>, %85, %cst_35 [1] : vector<8x8xf32> to vector<8xf32>
    %87 = vector.shape_cast %86 : vector<8xf32> to vector<8x1xf32>
    %88 = tpu.reciprocal %87 {approx = true} : vector<8x1xf32> -> vector<8x1xf32>
    %89 = vector.broadcast %88 : vector<8x1xf32> to vector<8x8xf32>
    %90 = arith.mulf %85, %89 : vector<8x8xf32>
    %cst_36 = arith.constant dense<0.000000e+00> : vector<8x8xf32>
    %91 = tpu.matmul %90, %75, %cst_36 {dimension_numbers = #tpu.dot_dimension_numbers<[1], [0], [0], [1], [0, 0, 1, 1], [], []>} : vector<8x8xf32>, vector<8x8xf32>, vector<8x8xf32> -> vector<8x8xf32>
    %92 = tpu.concatenate %34, %53, %72, %91 in 1 : vector<8x8xf32>, vector<8x8xf32>, vector<8x8xf32>, vector<8x8xf32> -> vector<8x32xf32>
    %cst_37 = arith.constant dense<0.000000e+00> : vector<8x32xf32>
    %93 = tpu.matmul %92, %6, %cst_37 {dimension_numbers = #tpu.dot_dimension_numbers<[1], [0], [0], [1], [0, 0, 1, 1], [], []>} : vector<8x32xf32>, vector<32x32xf32>, vector<8x32xf32> -> vector<8x32xf32>
    %94 = vector.broadcast %7 : vector<1x32xf32> to vector<8x32xf32>
    %95 = arith.addf %93, %94 : vector<8x32xf32>
    %96 = arith.addf %95, %1 : vector<8x32xf32>
    %cst_38 = arith.constant dense<0.000000e+00> : vector<8xf32>
    %97 = vector.multi_reduction <add>, %96, %cst_38 [1] : vector<8x32xf32> to vector<8xf32>
    %98 = vector.shape_cast %97 : vector<8xf32> to vector<8x1xf32>
    %cst_39 = arith.constant 3.200000e+01 : f32
    %99 = vector.broadcast %cst_39 : f32 to vector<8x1xf32>
    %100 = arith.divf %98, %99 : vector<8x1xf32>
    %101 = vector.broadcast %100 : vector<8x1xf32> to vector<8x32xf32>
    %102 = arith.subf %96, %101 : vector<8x32xf32>
    %103 = arith.mulf %102, %102 : vector<8x32xf32>
    %cst_40 = arith.constant dense<0.000000e+00> : vector<8xf32>
    %104 = vector.multi_reduction <add>, %103, %cst_40 [1] : vector<8x32xf32> to vector<8xf32>
    %105 = vector.shape_cast %104 : vector<8xf32> to vector<8x1xf32>
    %cst_41 = arith.constant 3.200000e+01 : f32
    %106 = vector.broadcast %cst_41 : f32 to vector<8x1xf32>
    %107 = arith.divf %105, %106 : vector<8x1xf32>
    %cst_42 = arith.constant 9.99999996E-13 : f32
    %108 = vector.broadcast %cst_42 : f32 to vector<8x1xf32>
    %109 = arith.addf %107, %108 : vector<8x1xf32>
    %110 = math.rsqrt %109 : vector<8x1xf32>
    %111 = vector.broadcast %110 : vector<8x1xf32> to vector<8x32xf32>
    %112 = arith.mulf %102, %111 : vector<8x32xf32>
    %113 = vector.broadcast %8 : vector<1x32xf32> to vector<8x32xf32>
    %114 = arith.mulf %113, %112 : vector<8x32xf32>
    %115 = vector.broadcast %9 : vector<1x32xf32> to vector<8x32xf32>
    %116 = arith.addf %114, %115 : vector<8x32xf32>
    %c0_43 = arith.constant 0 : index
    %c0_44 = arith.constant 0 : index
    %c0_45 = arith.constant 0 : index
    %117 = vector.load %arg9[%c0_43, %c0_44, %c0_45] : memref<1x8x32xf32, #tpu.memory_space<vmem>>, vector<1x8x32xf32>
    %118 = vector.shape_cast %117 : vector<1x8x32xf32> to vector<8x32xf32>
    %119 = vector.shape_cast %116 : vector<8x32xf32> to vector<1x8x32xf32>
    tpu.vector_store %arg9[%c0_43, %c0_44, %c0_45], %119 {strides = array<i32>} : memref<1x8x32xf32, #tpu.memory_space<vmem>>, vector<1x8x32xf32>,
    return
  }
  func.func @transform_0(%arg0: i32) -> (i32, i32, i32) {
    %c0_i32 = arith.constant 0 : i32
    %c0_i32_0 = arith.constant 0 : i32
    %c0_i32_1 = arith.constant 0 : i32
    return %arg0, %c0_i32, %c0_i32_0 : i32, i32, i32
  }
  func.func @transform_1(%arg0: i32) -> (i32, i32, i32) {
    %c0_i32 = arith.constant 0 : i32
    %c0_i32_0 = arith.constant 0 : i32
    %c0_i32_1 = arith.constant 0 : i32
    return %arg0, %c0_i32, %c0_i32_0 : i32, i32, i32
  }
  func.func @transform_2(%arg0: i32) -> (i32, i32) {
    %c0_i32 = arith.constant 0 : i32
    %c0_i32_0 = arith.constant 0 : i32
    %c0_i32_1 = arith.constant 0 : i32
    return %c0_i32, %c0_i32_0 : i32, i32
  }
  func.func @transform_3(%arg0: i32) -> (i32, i32) {
    %c0_i32 = arith.constant 0 : i32
    %c0_i32_0 = arith.constant 0 : i32
    %c0_i32_1 = arith.constant 0 : i32
    return %c0_i32, %c0_i32_0 : i32, i32
  }
  func.func @transform_4(%arg0: i32) -> (i32, i32) {
    %c0_i32 = arith.constant 0 : i32
    %c0_i32_0 = arith.constant 0 : i32
    %c0_i32_1 = arith.constant 0 : i32
    return %c0_i32, %c0_i32_0 : i32, i32
  }
  func.func @transform_5(%arg0: i32) -> (i32, i32) {
    %c0_i32 = arith.constant 0 : i32
    %c0_i32_0 = arith.constant 0 : i32
    %c0_i32_1 = arith.constant 0 : i32
    return %c0_i32, %c0_i32_0 : i32, i32
  }
  func.func @transform_6(%arg0: i32) -> (i32, i32) {
    %c0_i32 = arith.constant 0 : i32
    %c0_i32_0 = arith.constant 0 : i32
    %c0_i32_1 = arith.constant 0 : i32
    return %c0_i32, %c0_i32_0 : i32, i32
  }
  func.func @transform_7(%arg0: i32) -> (i32, i32) {
    %c0_i32 = arith.constant 0 : i32
    %c0_i32_0 = arith.constant 0 : i32
    %c0_i32_1 = arith.constant 0 : i32
    return %c0_i32, %c0_i32_0 : i32, i32
  }
  func.func @transform_8(%arg0: i32) -> (i32, i32, i32) {
    %c0_i32 = arith.constant 0 : i32
    %c0_i32_0 = arith.constant 0 : i32
    %c0_i32_1 = arith.constant 0 : i32
    return %arg0, %c0_i32, %c0_i32_0 : i32, i32, i32
  }
}

</mosaic_0001>

<llo_original>
// kernel: tpu_custom_call.1
$region0: #{tpu_custom_call.1}
  #allocation0 [shape = 'u32[]', space=smem, size = 0x4, offset = 0x4, fixed_abs, tag = 'smem constant byte address 0x4 - core index']
  #allocation1 [shape = 'u32[144,128]{1,0:T(1,128)}', space=vmem, size = 0x12000, scoped, tag = 'internal scratch']
  %s0 = inlined_call_operand.hbm [shape: f32[2,8,32], index: 0, kind: input, shape index: {}]
  %s1 = inlined_call_operand.hbm [shape: f32[2,1,8], index: 1, kind: input, shape index: {}]
  %s2 = inlined_call_operand.hbm [shape: f32[32,96], index: 2, kind: input, shape index: {}]
  %s3 = inlined_call_operand.vmem [shape: f32[1,96], index: 3, kind: input, shape index: {}]
  %s4 = inlined_call_operand.hbm [shape: f32[32,32], index: 4, kind: input, shape index: {}]
  %s5 = inlined_call_operand.vmem [shape: f32[1,32], index: 5, kind: input, shape index: {}]
  %s6 = inlined_call_operand.vmem [shape: f32[1,32], index: 6, kind: input, shape index: {}]
  %s7 = inlined_call_operand.vmem [shape: f32[1,32], index: 7, kind: input, shape index: {}]
  %s8 = inlined_call_operand.hbm [shape: f32[2,8,32], index: 8, kind: output, shape index: {}]
  %s9 = sld [smem:[#allocation0]]
  $region81: #{tpu_custom_call.1} parent=0
    _
  %s11 = ssub.s32 1, %s9
  %s12 = scalar_select 0, %s11, %s9
  $region1: #{tpu_custom_call.1} parent=0
    #allocation2 [shape = 'u8[8192]{0}', space=vmem, size = 0x2000, scoped, tag = 'input window, operand 0']
    #allocation3 [shape = 's32[2]{0}', space=sflag, size = 0x8, scoped, tag = 'scoped memory for tpu_custom_call.1']
    #allocation4 [shape = 's32[2]{0}', space=sflag, size = 0x8, scoped, tag = 'scoped memory for tpu_custom_call.1']
    #allocation5 [shape = 'u8[1024]{0}', space=vmem, size = 0x400, scoped, tag = 'input window, operand 1']
    #allocation6 [shape = 's32[2]{0}', space=sflag, size = 0x8, scoped, tag = 'scoped memory for tpu_custom_call.1']
    #allocation7 [shape = 'u8[16384]{0}', space=vmem, size = 0x4000, scoped, tag = 'input window, operand 2, single buffered']
    #allocation8 [shape = 'u8[16384]{0}', space=vmem, size = 0x4000, scoped, tag = 'input window, operand 4, single buffered']
    #allocation9 [shape = 's32[1]{0}', space=sflag, size = 0x4, scoped, tag = 'scoped memory for tpu_custom_call.1']
    #allocation10 [shape = 'u8[8192]{0}', space=vmem, size = 0x2000, scoped, tag = 'output window, operand 0']
    %13 = vsyncpa [#allocation3], 0
    %s14 = scalar_lea.sflag [#allocation3], 1
    %15 = vsyncpa %s14, 0
    %16 = vsyncpa [#allocation6], 0
    %s17 = scalar_lea.sflag [#allocation6], 1
    %18 = vsyncpa %s17, 0
    %19 = vsyncpa [#allocation9], 0
    %20 = vsyncpa [#allocation4], 0
    %s21 = scalar_lea.sflag [#allocation4], 1
    %22 = vsyncpa %s21, 0
    loop: start=0, step=1, limit=4
    $region2: #{tpu_custom_call.1} parent=1 // loop_pre_header
      _
    $region3: #{tpu_custom_call.1} parent=1 // loop_header
      %s24 = sphi 0, %s28
      %p25 = scmp.ge.s32.totalorder %s24, 4
      %s34 = sphi 0, %s36
      %s37 = sphi 0, %s34
      %s38 = sphi 0, %s37
      %s54 = sphi 0, %s38
      %s60 = sphi 0, %s62
      %s63 = sphi 0, %s60
      %s64 = sphi 0, %s63
      %s80 = sphi 0, %s64
      %s84 = sphi 0, %s84
      %s86 = sphi 0, %s84
      %s87 = sphi 0, %s86
      %s101 = sphi 0, %s87
      %s105 = sphi 0, %s105
      %s107 = sphi 0, %s105
      %s108 = sphi 0, %s107
      %s122 = sphi 0, %s108
      %s126 = sphi 0, %s126
      %s128 = sphi 0, %s126
      %s129 = sphi 0, %s128
      %s143 = sphi 0, %s129
      %s147 = sphi 0, %s147
      %s149 = sphi 0, %s147
      %s150 = sphi 0, %s149
      %s164 = sphi 0, %s150
      %s168 = sphi 0, %s168
      %s170 = sphi 0, %s168
      %s171 = sphi 0, %s170
      %s185 = sphi 0, %s171
      %s189 = sphi 0, %s189
      %s191 = sphi 0, %s189
      %s192 = sphi 0, %s191
      %s206 = sphi 0, %s192
      %s212 = sphi 0, %s214
      %s215 = sphi 0, %s212
      %s216 = sphi 0, %s215
      %s232 = sphi 0, %s216
    $region4: #{tpu_custom_call.1} parent=1 // loop_header_branch
      %27 = sbr.rel (%p25) target = $region8
    $region5: #{tpu_custom_call.1} parent=1 // loop_body
      %s29 = ssub.s32 %s24, 1
      %s30 = ssub.s32 %s24, 2
      %s31 = sadd.s32 %s24, 1
      %s32 = ssub.s32 %s24, %s31
      %p33 = scmp.eq.s32.totalorder %s32, 0
      %s35 = sadd.s32 %s34, 1
      %s36 = scalar_select %p33, %s34, %s35
      %p39 = pneg %p33
      %p40 = scmp.eq.s32.totalorder %s24, 1
      %p41 = por %p39, %p40
      %p42 = scmp.ne.s32.totalorder %s34, %s37
      %p43 = scmp.eq.s32.totalorder %s24, 0
      %p44 = por %p42, %p43
      %p45 = scmp.ne.s32.totalorder %s34, %s37
      %p46 = scmp.eq.s32.totalorder %s29, 1
      %p47 = por %p45, %p46
      %p48 = scmp.ne.s32.totalorder %s37, %s38
      %p49 = scmp.eq.s32.totalorder %s29, 0
      %p50 = por %p48, %p49
      %p51 = scmp.ne.s32.totalorder %s37, %s38
      %p52 = scmp.eq.s32.totalorder %s30, 1
      %p53 = por %p51, %p52
      %p55 = scmp.ne.s32.totalorder %s38, %s54
      %p56 = scmp.eq.s32.totalorder %s30, 0
      %p57 = por %p55, %p56
      %s58 = ssub.s32 %s24, %s31
      %p59 = scmp.eq.s32.totalorder %s58, 0
      %s61 = sadd.s32 %s60, 1
      %s62 = scalar_select %p59, %s60, %s61
      %p65 = pneg %p59
      %p66 = scmp.eq.s32.totalorder %s24, 1
      %p67 = por %p65, %p66
      %p68 = scmp.ne.s32.totalorder %s60, %s63
      %p69 = scmp.eq.s32.totalorder %s24, 0
      %p70 = por %p68, %p69
      %p71 = scmp.ne.s32.totalorder %s60, %s63
      %p72 = scmp.eq.s32.totalorder %s29, 1
      %p73 = por %p71, %p72
      %p74 = scmp.ne.s32.totalorder %s63, %s64
      %p75 = scmp.eq.s32.totalorder %s29, 0
      %p76 = por %p74, %p75
      %p77 = scmp.ne.s32.totalorder %s63, %s64
      %p78 = scmp.eq.s32.totalorder %s30, 1
      %p79 = por %p77, %p78
      %p81 = scmp.ne.s32.totalorder %s64, %s80
      %p82 = scmp.eq.s32.totalorder %s30, 0
      %p83 = por %p81, %p82
      %s85 = sadd.s32 %s84, 1
      %p88 = scmp.eq.s32.totalorder %s24, 1
      %p89 = scmp.ne.s32.totalorder %s84, %s86
      %p90 = scmp.eq.s32.totalorder %s24, 0
      %p91 = por %p89, %p90
      %p92 = scmp.ne.s32.totalorder %s84, %s86
      %p93 = scmp.eq.s32.totalorder %s29, 1
      %p94 = por %p92, %p93
      %p95 = scmp.ne.s32.totalorder %s86, %s87
      %p96 = scmp.eq.s32.totalorder %s29, 0
      %p97 = por %p95, %p96
      %p98 = scmp.ne.s32.totalorder %s86, %s87
      %p99 = scmp.eq.s32.totalorder %s30, 1
      %p100 = por %p98, %p99
      %p102 = scmp.ne.s32.totalorder %s87, %s101
      %p103 = scmp.eq.s32.totalorder %s30, 0
      %p104 = por %p102, %p103
      %s106 = sadd.s32 %s105, 1
      %p109 = scmp.eq.s32.totalorder %s24, 1
      %p110 = scmp.ne.s32.totalorder %s105, %s107
      %p111 = scmp.eq.s32.totalorder %s24, 0
      %p112 = por %p110, %p111
      %p113 = scmp.ne.s32.totalorder %s105, %s107
      %p114 = scmp.eq.s32.totalorder %s29, 1
      %p115 = por %p113, %p114
      %p116 = scmp.ne.s32.totalorder %s107, %s108
      %p117 = scmp.eq.s32.totalorder %s29, 0
      %p118 = por %p116, %p117
      %p119 = scmp.ne.s32.totalorder %s107, %s108
      %p120 = scmp.eq.s32.totalorder %s30, 1
      %p121 = por %p119, %p120
      %p123 = scmp.ne.s32.totalorder %s108, %s122
      %p124 = scmp.eq.s32.totalorder %s30, 0
      %p125 = por %p123, %p124
      %s127 = sadd.s32 %s126, 1
      %p130 = scmp.eq.s32.totalorder %s24, 1
      %p131 = scmp.ne.s32.totalorder %s126, %s128
      %p132 = scmp.eq.s32.totalorder %s24, 0
      %p133 = por %p131, %p132
      %p134 = scmp.ne.s32.totalorder %s126, %s128
      %p135 = scmp.eq.s32.totalorder %s29, 1
      %p136 = por %p134, %p135
      %p137 = scmp.ne.s32.totalorder %s128, %s129
      %p138 = scmp.eq.s32.totalorder %s29, 0
      %p139 = por %p137, %p138
      %p140 = scmp.ne.s32.totalorder %s128, %s129
      %p141 = scmp.eq.s32.totalorder %s30, 1
      %p142 = por %p140, %p141
      %p144 = scmp.ne.s32.totalorder %s129, %s143
      %p145 = scmp.eq.s32.totalorder %s30, 0
      %p146 = por %p144, %p145
      %s148 = sadd.s32 %s147, 1
      %p151 = scmp.eq.s32.totalorder %s24, 1
      %p152 = scmp.ne.s32.totalorder %s147, %s149
      %p153 = scmp.eq.s32.totalorder %s24, 0
      %p154 = por %p152, %p153
      %p155 = scmp.ne.s32.totalorder %s147, %s149
      %p156 = scmp.eq.s32.totalorder %s29, 1
      %p157 = por %p155, %p156
      %p158 = scmp.ne.s32.totalorder %s149, %s150
      %p159 = scmp.eq.s32.totalorder %s29, 0
      %p160 = por %p158, %p159
      %p161 = scmp.ne.s32.totalorder %s149, %s150
      %p162 = scmp.eq.s32.totalorder %s30, 1
      %p163 = por %p161, %p162
      %p165 = scmp.ne.s32.totalorder %s150, %s164
      %p166 = scmp.eq.s32.totalorder %s30, 0
      %p167 = por %p165, %p166
      %s169 = sadd.s32 %s168, 1
      %p172 = scmp.eq.s32.totalorder %s24, 1
      %p173 = scmp.ne.s32.totalorder %s168, %s170
      %p174 = scmp.eq.s32.totalorder %s24, 0
      %p175 = por %p173, %p174
      %p176 = scmp.ne.s32.totalorder %s168, %s170
      %p177 = scmp.eq.s32.totalorder %s29, 1
      %p178 = por %p176, %p177
      %p179 = scmp.ne.s32.totalorder %s170, %s171
      %p180 = scmp.eq.s32.totalorder %s29, 0
      %p181 = por %p179, %p180
      %p182 = scmp.ne.s32.totalorder %s170, %s171
      %p183 = scmp.eq.s32.totalorder %s30, 1
      %p184 = por %p182, %p183
      %p186 = scmp.ne.s32.totalorder %s171, %s185
      %p187 = scmp.eq.s32.totalorder %s30, 0
      %p188 = por %p186, %p187
      %s190 = sadd.s32 %s189, 1
      %p193 = scmp.eq.s32.totalorder %s24, 1
      %p194 = scmp.ne.s32.totalorder %s189, %s191
      %p195 = scmp.eq.s32.totalorder %s24, 0
      %p196 = por %p194, %p195
      %p197 = scmp.ne.s32.totalorder %s189, %s191
      %p198 = scmp.eq.s32.totalorder %s29, 1
      %p199 = por %p197, %p198
      %p200 = scmp.ne.s32.totalorder %s191, %s192
      %p201 = scmp.eq.s32.totalorder %s29, 0
      %p202 = por %p200, %p201
      %p203 = scmp.ne.s32.totalorder %s191, %s192
      %p204 = scmp.eq.s32.totalorder %s30, 1
      %p205 = por %p203, %p204
      %p207 = scmp.ne.s32.totalorder %s192, %s206
      %p208 = scmp.eq.s32.totalorder %s30, 0
      %p209 = por %p207, %p208
      %s210 = ssub.s32 %s24, %s31
      %p211 = scmp.eq.s32.totalorder %s210, 0
      %s213 = sadd.s32 %s212, 1
      %s214 = scalar_select %p211, %s212, %s213
      %p217 = pneg %p211
      %p218 = scmp.eq.s32.totalorder %s24, 1
      %p219 = por %p217, %p218
      %p220 = scmp.ne.s32.totalorder %s212, %s215
      %p221 = scmp.eq.s32.totalorder %s24, 0
      %p222 = por %p220, %p221
      %p223 = scmp.ne.s32.totalorder %s212, %s215
      %p224 = scmp.eq.s32.totalorder %s29, 1
      %p225 = por %p223, %p224
      %p226 = scmp.ne.s32.totalorder %s215, %s216
      %p227 = scmp.eq.s32.totalorder %s29, 0
      %p228 = por %p226, %p227
      %p229 = scmp.ne.s32.totalorder %s215, %s216
      %p230 = scmp.eq.s32.totalorder %s30, 1
      %p231 = por %p229, %p230
      %p233 = scmp.ne.s32.totalorder %s216, %s232
      %p234 = scmp.eq.s32.totalorder %s30, 0
      %p235 = por %p233, %p234
      %p236 = scmp.le.s32.totalorder 1, %s24
      %p237 = scmp.lt.s32.totalorder %s24, 3
      %p238 = pnand %p236, %p237
      %p239 = pneg %p238
      // Predicated region
      $region9: #{tpu_custom_call.1} parent=5 // pred_check
        _
      $region10: #{tpu_custom_call.1} parent=5 // pred_check_branch
        %241 = sbr.rel (%p238) target = $region12
      $region11: #{tpu_custom_call.1} parent=5 // pred_region
        %s242 = ssub.s32 %s24, 1
        // Predicated region
        $region13: #{tpu_custom_call.1} parent=11 // pred_check
          %p243 = pneg %p97
        $region14: #{tpu_custom_call.1} parent=11 // pred_check_branch
          %245 = sbr.rel (%p243) target = $region16
        $region15: #{tpu_custom_call.1} parent=11 // pred_region
          %s247 = ssub.s32 512, 512
          %248 = vsyncadd [#allocation6], %s247
          %s249 = sshll.u32 [#allocation7], 4
          %s250 = int_to_ptr.vmem [resolvable:$true] %s249
          %255 = dma.hbm_to_vmem [thread:$0]  %s2, 512, %s250, [#allocation6], 128, 128, 8
        $region16: #{tpu_custom_call.1} parent=11 // pred_fallthru
          _
        // Predicated region
        $region17: #{tpu_custom_call.1} parent=11 // pred_check
          %p256 = pneg %p118
        $region18: #{tpu_custom_call.1} parent=11 // pred_check_branch
          %258 = sbr.rel (%p256) target = $region20
        $region19: #{tpu_custom_call.1} parent=11 // pred_region
          _
        $region20: #{tpu_custom_call.1} parent=11 // pred_fallthru
          _
        // Predicated region
        $region21: #{tpu_custom_call.1} parent=11 // pred_check
          %p259 = pneg %p139
        $region22: #{tpu_custom_call.1} parent=11 // pred_check_branch
          %261 = sbr.rel (%p259) target = $region24
        $region23: #{tpu_custom_call.1} parent=11 // pred_region
          %s263 = ssub.s32 512, 512
          %264 = vsyncadd [#allocation9], %s263
          %s265 = sshll.u32 [#allocation8], 4
          %s266 = int_to_ptr.vmem [resolvable:$true] %s265
          %271 = dma.hbm_to_vmem [thread:$0]  %s4, 512, %s266, [#allocation9], 128, 128, 8
        $region24: #{tpu_custom_call.1} parent=11 // pred_fallthru
          _
        // Predicated region
        $region25: #{tpu_custom_call.1} parent=11 // pred_check
          %p272 = pneg %p160
        $region26: #{tpu_custom_call.1} parent=11 // pred_check_branch
          %274 = sbr.rel (%p272) target = $region28
        $region27: #{tpu_custom_call.1} parent=11 // pred_region
          _
        $region28: #{tpu_custom_call.1} parent=11 // pred_fallthru
          _
        // Predicated region
        $region29: #{tpu_custom_call.1} parent=11 // pred_check
          %p275 = pneg %p181
        $region30: #{tpu_custom_call.1} parent=11 // pred_check_branch
          %277 = sbr.rel (%p275) target = $region32
        $region31: #{tpu_custom_call.1} parent=11 // pred_region
          _
        $region32: #{tpu_custom_call.1} parent=11 // pred_fallthru
          _
        // Predicated region
        $region33: #{tpu_custom_call.1} parent=11 // pred_check
          %p278 = pneg %p202
        $region34: #{tpu_custom_call.1} parent=11 // pred_check_branch
          %280 = sbr.rel (%p278) target = $region36
        $region35: #{tpu_custom_call.1} parent=11 // pred_region
          _
        $region36: #{tpu_custom_call.1} parent=11 // pred_fallthru
          _
      $region12: #{tpu_custom_call.1} parent=5 // pred_fallthru
        _
      %p281 = scmp.lt.s32.totalorder %s24, 2
      // Predicated region
      $region37: #{tpu_custom_call.1} parent=5 // pred_check
        %p282 = pneg %p281
      $region38: #{tpu_custom_call.1} parent=5 // pred_check_branch
        %284 = sbr.rel (%p282) target = $region40
      $region39: #{tpu_custom_call.1} parent=5 // pred_region
        // Predicated region
        $region41: #{tpu_custom_call.1} parent=39 // pred_check
          %p285 = pneg %p44
        $region42: #{tpu_custom_call.1} parent=39 // pred_check_branch
          %287 = sbr.rel (%p285) target = $region44
        $region43: #{tpu_custom_call.1} parent=39 // pred_region
          %s288 = sand.u32 %s34, 1
          %s289 = scalar_lea.sflag [#allocation3], %s288
          %s290 = sand.u32 %s34, 1
          %s291 = smul.addr %s290, 8
          %s292 = scalar_lea.vmem [#allocation2], %s291
          %s294 = ssub.s32 128, 128
          %295 = vsyncadd %s289, %s294
          %s296 = smul.addr %s24, 128
          %s297 = scalar_lea.hbm %s0, %s296
          %s299 = sshll.u32 %s292, 4
          %s300 = int_to_ptr.vmem [resolvable:$true] %s299
          %302 = dma.hbm_to_vmem [thread:$0]  %s297, 128, %s300, %s289
        $region44: #{tpu_custom_call.1} parent=39 // pred_fallthru
          _
        // Predicated region
        $region45: #{tpu_custom_call.1} parent=39 // pred_check
          %p303 = pneg %p70
        $region46: #{tpu_custom_call.1} parent=39 // pred_check_branch
          %305 = sbr.rel (%p303) target = $region48
        $region47: #{tpu_custom_call.1} parent=39 // pred_region
          %s306 = sand.u32 %s24, 1
          %s307 = scalar_lea.sflag [#allocation6], %s306
          %s308 = sand.u32 %s60, 1
          %s309 = scalar_lea.vmem [#allocation5], %s308
          %s311 = ssub.s32 16, 16
          %312 = vsyncadd %s307, %s311
          %s313 = smul.addr %s24, 16
          %s314 = scalar_lea.hbm %s1, %s313
          %s316 = sshll.u32 %s309, 4
          %s317 = int_to_ptr.vmem [resolvable:$true] %s316
          %319 = dma.hbm_to_vmem [thread:$0]  %s314, 16, %s317, %s307
        $region48: #{tpu_custom_call.1} parent=39 // pred_fallthru
          _
      $region40: #{tpu_custom_call.1} parent=5 // pred_fallthru
        _
      %p320 = scmp.le.s32.totalorder 1, %s24
      %p321 = scmp.lt.s32.totalorder %s24, 3
      %p322 = pnand %p320, %p321
      %p323 = pneg %p322
      // Predicated region
      $region49: #{tpu_custom_call.1} parent=5 // pred_check
        _
      $region50: #{tpu_custom_call.1} parent=5 // pred_check_branch
        %325 = sbr.rel (%p322) target = $region52
      $region51: #{tpu_custom_call.1} parent=5 // pred_region
        %s326 = ssub.s32 %s24, 1
        %s327 = sand.u32 %s37, 1
        %s328 = scalar_lea.sflag [#allocation3], %s327
        %s329 = sand.u32 %s37, 1
        %s330 = smul.addr %s329, 8
        %s331 = scalar_lea.vmem [#allocation2], %s330
        // Predicated region
        $region53: #{tpu_custom_call.1} parent=51 // pred_check
          %p332 = pneg %p50
        $region54: #{tpu_custom_call.1} parent=51 // pred_check_branch
          %334 = sbr.rel (%p332) target = $region56
        $region55: #{tpu_custom_call.1} parent=51 // pred_region
          %335 = dma.done %s328, 128
        $region56: #{tpu_custom_call.1} parent=51 // pred_fallthru
          _
        %s336 = sand.u32 %s29, 1
        %s337 = scalar_lea.sflag [#allocation6], %s336
        %s338 = sand.u32 %s63, 1
        %s339 = scalar_lea.vmem [#allocation5], %s338
        // Predicated region
        $region57: #{tpu_custom_call.1} parent=51 // pred_check
          %p340 = pneg %p76
        $region58: #{tpu_custom_call.1} parent=51 // pred_check_branch
          %342 = sbr.rel (%p340) target = $region60
        $region59: #{tpu_custom_call.1} parent=51 // pred_region
          %343 = dma.done %s337, 16
        $region60: #{tpu_custom_call.1} parent=51 // pred_fallthru
          _
        // Predicated region
        $region61: #{tpu_custom_call.1} parent=51 // pred_check
          %p344 = pneg %p97
        $region62: #{tpu_custom_call.1} parent=51 // pred_check_branch
          %346 = sbr.rel (%p344) target = $region64
        $region63: #{tpu_custom_call.1} parent=51 // pred_region
          %347 = dma.done [#allocation6], 512
        $region64: #{tpu_custom_call.1} parent=51 // pred_fallthru
          _
        // Predicated region
        $region65: #{tpu_custom_call.1} parent=51 // pred_check
          %p348 = pneg %p139
        $region66: #{tpu_custom_call.1} parent=51 // pred_check_branch
          %350 = sbr.rel (%p348) target = $region68
        $region67: #{tpu_custom_call.1} parent=51 // pred_region
          %351 = dma.done [#allocation9], 512
        $region68: #{tpu_custom_call.1} parent=51 // pred_fallthru
          _
        %s352 = sand.u32 %s37, 1
        %s353 = scalar_lea.sflag [#allocation3], %s352
        %s354 = sand.u32 %s37, 1
        %s355 = smul.addr %s354, 8
        %s356 = scalar_lea.vmem [#allocation2], %s355
        %p357 = pneg %p50
        %p358 = pneg %p47
        %s359 = sand.u32 %s29, 1
        %s360 = scalar_lea.sflag [#allocation6], %s359
        %s361 = sand.u32 %s63, 1
        %s362 = scalar_lea.vmem [#allocation5], %s361
        %p363 = pneg %p76
        %p364 = pneg %p73
        %p365 = pneg %p97
        %p366 = pneg %p94
        %p367 = pneg %p118
        %p368 = pneg %p115
        %p369 = pneg %p139
        %p370 = pneg %p136
        %p371 = pneg %p160
        %p372 = pneg %p157
        %p373 = pneg %p181
        %p374 = pneg %p178
        %p375 = pneg %p202
        %p376 = pneg %p199
        %p377 = pneg %p228
        %p378 = pneg %p225
        %s379 = sand.u32 %s215, 1
        %s380 = scalar_lea.sflag [#allocation4], %s379
        %s381 = sand.u32 %s215, 1
        %s382 = smul.addr %s381, 8
        %s383 = scalar_lea.vmem [#allocation10], %s382
        %v384 = vld [vmem:[%s331] sm:$0xff]
        %v385 = vld [vmem:[%s339] sm:$0x1]
        %v386 = vld [vmem:[#allocation7] sm:$0xff]
        %v387 = vld [vmem:[#allocation7 + $0x8] sm:$0xff]
        %v388 = vld [vmem:[#allocation7 + $0x10] sm:$0xff]
        %v389 = vld [vmem:[#allocation7 + $0x18] sm:$0xff]
        %v390 = vld [vmem:[%s3] sm:$0x1]
        %v391 = vld [vmem:[#allocation8] sm:$0xff]
        %v392 = vld [vmem:[#allocation8 + $0x8] sm:$0xff]
        %v393 = vld [vmem:[#allocation8 + $0x10] sm:$0xff]
        %v394 = vld [vmem:[#allocation8 + $0x18] sm:$0xff]
        %v395 = vld [vmem:[%s5] sm:$0x1]
        %v396 = vld [vmem:[%s6] sm:$0x1]
        %v397 = vld [vmem:[%s7] sm:$0x1]
        %v399 = vlaneseq
        %v400 = vshrl.u32 %v399, 7
        %v401 = vsub.s32 0, %v400
        %v402 = vrot.slane %v390, %v401
        %vm404 = vcmask 261120
        %v406 = vsel %vm404, %v384, 0
        %408 = vmatprep.subr.mxu0 0.0
        %409 = vmatpush1.msra.mxu0 0.0
        %410 = vmatprep.subr.mxu0 0.0
        %411 = vmatpush1.msra.mxu0 0.0
        %412 = vmatprep.subr.mxu0 0.0
        %413 = vmatpush1.msra.mxu0 0.0
        %414 = vmatprep.subr.mxu0 0.0
        %415 = vmatpush1.msra.mxu0 0.0
        %416 = vmatprep.subr.mxu0 0.0
        %417 = vmatpush1.msra.mxu0 0.0
        %418 = vmatprep.subr.mxu0 0.0
        %419 = vmatpush1.msra.mxu0 0.0
        %420 = vmatprep.subr.mxu0 0.0
        %421 = vmatpush1.msra.mxu0 0.0
        %422 = vmatprep.subr.mxu0 0.0
        %423 = vmatpush1.msra.mxu0 0.0
        %424 = vmatprep.subr.mxu0 0.0
        %425 = vmatpush1.msra.mxu0 0.0
        %426 = vmatprep.subr.mxu0 0.0
        %427 = vmatpush1.msra.mxu0 0.0
        %428 = vmatprep.subr.mxu0 0.0
        %429 = vmatpush1.msra.mxu0 0.0
        %430 = vmatprep.subr.mxu0 0.0
        %431 = vmatpush1.msra.mxu0 0.0
        %432 = vmatprep.subr.mxu0 0.0
        %433 = vmatpush1.msra.mxu0 %v389
        %434 = vmatprep.subr.mxu0 0.0
        %435 = vmatpush1.msra.mxu0 %v388
        %436 = vmatprep.subr.mxu0 0.0
        %437 = vmatpush1.msra.mxu0 %v387
        %438 = vmatprep.subr.mxu0 0.0
        %439 = vmatpush1.msra.mxu0 %v386
        %440 = vmatprep.subr.mxu0 0.0
        %441 = vmatpush2.msra.mxu0 0.0
        %442 = vmatprep.subr.mxu0 0.0
        %443 = vmatpush2.msra.mxu0 0.0
        %444 = vmatprep.subr.mxu0 0.0
        %445 = vmatpush2.msra.mxu0 0.0
        %446 = vmatprep.subr.mxu0 0.0
        %447 = vmatpush2.msra.mxu0 0.0
        %448 = vmatprep.subr.mxu0 0.0
        %449 = vmatpush2.msra.mxu0 0.0
        %450 = vmatprep.subr.mxu0 0.0
        %451 = vmatpush2.msra.mxu0 0.0
        %452 = vmatprep.subr.mxu0 0.0
        %453 = vmatpush2.msra.mxu0 0.0
        %454 = vmatprep.subr.mxu0 0.0
        %455 = vmatpush2.msra.mxu0 0.0
        %456 = vmatprep.subr.mxu0 0.0
        %457 = vmatpush2.msra.mxu0 0.0
        %458 = vmatprep.subr.mxu0 0.0
        %459 = vmatpush2.msra.mxu0 0.0
        %460 = vmatprep.subr.mxu0 0.0
        %461 = vmatpush2.msra.mxu0 0.0
        %462 = vmatprep.subr.mxu0 0.0
        %463 = vmatpush2.msra.mxu0 0.0
        %464 = vmatprep.subr.mxu0 0.0
        %465 = vmatpush2.msra.mxu0 0.0
        %466 = vmatprep.subr.mxu0 0.0
        %467 = vmatpush2.msra.mxu0 0.0
        %468 = vmatprep.subr.mxu0 0.0
        %469 = vmatpush2.msra.mxu0 0.0
        %470 = vmatprep.subr.mxu0 0.0
        %471 = vmatpush2.msra.mxu0 0.0
        %472 = vmatprep.mubr.f32.mxu0 0.0
        %473 = vmatmul.mubr.f32.gmra.mxu0 %v406
        %v474 = vpop.f32.mrf.mxu0
        %v475 = vadd.f32 %v402, %v474
        %v476 = vpop.f32.mrf.mxu0
        %477 = vdwg.mxu0
        %479 = vrot.lane.b32.xlu0 %v475, 96
        %v480 = vpop.permute.xlu0 %479
        %vm481 = vcmask 64512
        %v482 = vsel %vm481, %v475, 0
        %v484 = vsel %vm481, %v480, 0
        %486 = vmatprep.subr.mxu0 0.0
        %487 = vmatpush1.xpose.msra.mxu0 0.0
        %488 = vmatprep.subr.mxu0 0.0
        %489 = vmatpush1.xpose.msra.mxu0 0.0
        %490 = vmatprep.subr.mxu0 0.0
        %491 = vmatpush1.xpose.msra.mxu0 0.0
        %492 = vmatprep.subr.mxu0 0.0
        %493 = vmatpush1.xpose.msra.mxu0 0.0
        %494 = vmatprep.subr.mxu0 0.0
        %495 = vmatpush1.xpose.msra.mxu0 0.0
        %496 = vmatprep.subr.mxu0 0.0
        %497 = vmatpush1.xpose.msra.mxu0 0.0
        %498 = vmatprep.subr.mxu0 0.0
        %499 = vmatpush1.xpose.msra.mxu0 0.0
        %500 = vmatprep.subr.mxu0 0.0
        %501 = vmatpush1.xpose.msra.mxu0 0.0
        %502 = vmatprep.subr.mxu0 0.0
        %503 = vmatpush1.xpose.msra.mxu0 0.0
        %504 = vmatprep.subr.mxu0 0.0
        %505 = vmatpush1.xpose.msra.mxu0 0.0
        %506 = vmatprep.subr.mxu0 0.0
        %507 = vmatpush1.xpose.msra.mxu0 0.0
        %508 = vmatprep.subr.mxu0 0.0
        %509 = vmatpush1.xpose.msra.mxu0 0.0
        %510 = vmatprep.subr.mxu0 0.0
        %511 = vmatpush1.xpose.msra.mxu0 0.0
        %512 = vmatprep.subr.mxu0 0.0
        %513 = vmatpush1.xpose.msra.mxu0 0.0
        %514 = vmatprep.subr.mxu0 0.0
        %515 = vmatpush1.xpose.msra.mxu0 0.0
        %516 = vmatprep.subr.mxu0 0.0
        %517 = vmatpush1.xpose.msra.mxu0 %v484
        %518 = vmatprep.subr.mxu0 0.0
        %519 = vmatpush2.xpose.msra.mxu0 0.0
        %520 = vmatprep.subr.mxu0 0.0
        %521 = vmatpush2.xpose.msra.mxu0 0.0
        %522 = vmatprep.subr.mxu0 0.0
        %523 = vmatpush2.xpose.msra.mxu0 0.0
        %524 = vmatprep.subr.mxu0 0.0
        %525 = vmatpush2.xpose.msra.mxu0 0.0
        %526 = vmatprep.subr.mxu0 0.0
        %527 = vmatpush2.xpose.msra.mxu0 0.0
        %528 = vmatprep.subr.mxu0 0.0
        %529 = vmatpush2.xpose.msra.mxu0 0.0
        %530 = vmatprep.subr.mxu0 0.0
        %531 = vmatpush2.xpose.msra.mxu0 0.0
        %532 = vmatprep.subr.mxu0 0.0
        %533 = vmatpush2.xpose.msra.mxu0 0.0
        %534 = vmatprep.subr.mxu0 0.0
        %535 = vmatpush2.xpose.msra.mxu0 0.0
        %536 = vmatprep.subr.mxu0 0.0
        %537 = vmatpush2.xpose.msra.mxu0 0.0
        %538 = vmatprep.subr.mxu0 0.0
        %539 = vmatpush2.xpose.msra.mxu0 0.0
        %540 = vmatprep.subr.mxu0 0.0
        %541 = vmatpush2.xpose.msra.mxu0 0.0
        %542 = vmatprep.subr.mxu0 0.0
        %543 = vmatpush2.xpose.msra.mxu0 0.0
        %544 = vmatprep.subr.mxu0 0.0
        %545 = vmatpush2.xpose.msra.mxu0 0.0
        %546 = vmatprep.subr.mxu0 0.0
        %547 = vmatpush2.xpose.msra.mxu0 0.0
        %548 = vmatprep.subr.mxu0 0.0
        %549 = vmatpush2.xpose.msra.mxu0 0.0
        %550 = vmatprep.mubr.f32.mxu0 0.0
        %551 = vmatmul.mubr.f32.gmra.mxu0 %v482
        %v552 = vpop.f32.mrf.mxu0
        %v553 = vadd.f32 0.0, %v552
        %v554 = vpop.f32.mrf.mxu0
        %555 = vdwg.mxu0
        %v556 = vmul.f32 %v553, 0.35355338
        %v558 = vlaneseq
        %v559 = vshrl.u32 %v558, 7
        %v560 = vsub.s32 0, %v559
        %v561 = vrot.slane %v385, %v560
        %v563 = vadd.f32 %v556, %v561
        %v564 = vsel %vm481, %v563, -inf
        %565 = vmax.xlane.f32.xlu0 %v564
        %v566 = vpop.xlane.xlu0 %565
        %v567 = vsub.f32 %v563, %v566
        %v568 = vmul.f32 %v567, 1.442695
        %v569 = vpow.pop %v568
        %v570 = vsel %vm481, %v569, 0.0
        %571 = vadd.xlane.f32.xlu0 %v570
        %v572 = vpop.xlane.xlu0 %571
        %v573 = vrcp.pop %v572
        %v574 = vmul.f32 %v569, %v573
        %575 = vrot.lane.b32.xlu0 %v475, 64
        %v576 = vpop.permute.xlu0 %575
        %v579 = vsel %vm481, %v574, 0
        %581 = vmatprep.subr.mxu0 0.0
        %582 = vmatpush1.msra.mxu0 0.0
        %583 = vmatprep.subr.mxu0 0.0
        %584 = vmatpush1.msra.mxu0 0.0
        %585 = vmatprep.subr.mxu0 0.0
        %586 = vmatpush1.msra.mxu0 0.0
        %587 = vmatprep.subr.mxu0 0.0
        %588 = vmatpush1.msra.mxu0 0.0
        %589 = vmatprep.subr.mxu0 0.0
        %590 = vmatpush1.msra.mxu0 0.0
        %591 = vmatprep.subr.mxu0 0.0
        %592 = vmatpush1.msra.mxu0 0.0
        %593 = vmatprep.subr.mxu0 0.0
        %594 = vmatpush1.msra.mxu0 0.0
        %595 = vmatprep.subr.mxu0 0.0
        %596 = vmatpush1.msra.mxu0 0.0
        %597 = vmatprep.subr.mxu0 0.0
        %598 = vmatpush1.msra.mxu0 0.0
        %599 = vmatprep.subr.mxu0 0.0
        %600 = vmatpush1.msra.mxu0 0.0
        %601 = vmatprep.subr.mxu0 0.0
        %602 = vmatpush1.msra.mxu0 0.0
        %603 = vmatprep.subr.mxu0 0.0
        %604 = vmatpush1.msra.mxu0 0.0
        %605 = vmatprep.subr.mxu0 0.0
        %606 = vmatpush1.msra.mxu0 0.0
        %607 = vmatprep.subr.mxu0 0.0
        %608 = vmatpush1.msra.mxu0 0.0
        %609 = vmatprep.subr.mxu0 0.0
        %610 = vmatpush1.msra.mxu0 0.0
        %611 = vmatprep.subr.mxu0 0.0
        %612 = vmatpush1.msra.mxu0 %v576
        %613 = vmatprep.subr.mxu0 0.0
        %614 = vmatpush2.msra.mxu0 0.0
        %615 = vmatprep.subr.mxu0 0.0
        %616 = vmatpush2.msra.mxu0 0.0
        %617 = vmatprep.subr.mxu0 0.0
        %618 = vmatpush2.msra.mxu0 0.0
        %619 = vmatprep.subr.mxu0 0.0
        %620 = vmatpush2.msra.mxu0 0.0
        %621 = vmatprep.subr.mxu0 0.0
        %622 = vmatpush2.msra.mxu0 0.0
        %623 = vmatprep.subr.mxu0 0.0
        %624 = vmatpush2.msra.mxu0 0.0
        %625 = vmatprep.subr.mxu0 0.0
        %626 = vmatpush2.msra.mxu0 0.0
        %627 = vmatprep.subr.mxu0 0.0
        %628 = vmatpush2.msra.mxu0 0.0
        %629 = vmatprep.subr.mxu0 0.0
        %630 = vmatpush2.msra.mxu0 0.0
        %631 = vmatprep.subr.mxu0 0.0
        %632 = vmatpush2.msra.mxu0 0.0
        %633 = vmatprep.subr.mxu0 0.0
        %634 = vmatpush2.msra.mxu0 0.0
        %635 = vmatprep.subr.mxu0 0.0
        %636 = vmatpush2.msra.mxu0 0.0
        %637 = vmatprep.subr.mxu0 0.0
        %638 = vmatpush2.msra.mxu0 0.0
        %639 = vmatprep.subr.mxu0 0.0
        %640 = vmatpush2.msra.mxu0 0.0
        %641 = vmatprep.subr.mxu0 0.0
        %642 = vmatpush2.msra.mxu0 0.0
        %643 = vmatprep.subr.mxu0 0.0
        %644 = vmatpush2.msra.mxu0 0.0
        %645 = vmatprep.mubr.f32.mxu0 0.0
        %646 = vmatmul.mubr.f32.gmra.mxu0 %v579
        %v647 = vpop.f32.mrf.mxu0
        %v648 = vadd.f32 0.0, %v647
        %v649 = vpop.f32.mrf.mxu0
        %650 = vdwg.mxu0
        %651 = vrot.lane.b32.xlu0 %v475, 120
        %v652 = vpop.permute.xlu0 %651
        %653 = vrot.lane.b32.xlu0 %v475, 88
        %v654 = vpop.permute.xlu0 %653
        %v655 = vsel %vm481, %v652, 0
        %v657 = vsel %vm481, %v654, 0
        %659 = vmatprep.subr.mxu0 0.0
        %660 = vmatpush1.xpose.msra.mxu0 0.0
        %661 = vmatprep.subr.mxu0 0.0
        %662 = vmatpush1.xpose.msra.mxu0 0.0
        %663 = vmatprep.subr.mxu0 0.0
        %664 = vmatpush1.xpose.msra.mxu0 0.0
        %665 = vmatprep.subr.mxu0 0.0
        %666 = vmatpush1.xpose.msra.mxu0 0.0
        %667 = vmatprep.subr.mxu0 0.0
        %668 = vmatpush1.xpose.msra.mxu0 0.0
        %669 = vmatprep.subr.mxu0 0.0
        %670 = vmatpush1.xpose.msra.mxu0 0.0
        %671 = vmatprep.subr.mxu0 0.0
        %672 = vmatpush1.xpose.msra.mxu0 0.0
        %673 = vmatprep.subr.mxu0 0.0
        %674 = vmatpush1.xpose.msra.mxu0 0.0
        %675 = vmatprep.subr.mxu0 0.0
        %676 = vmatpush1.xpose.msra.mxu0 0.0
        %677 = vmatprep.subr.mxu0 0.0
        %678 = vmatpush1.xpose.msra.mxu0 0.0
        %679 = vmatprep.subr.mxu0 0.0
        %680 = vmatpush1.xpose.msra.mxu0 0.0
        %681 = vmatprep.subr.mxu0 0.0
        %682 = vmatpush1.xpose.msra.mxu0 0.0
        %683 = vmatprep.subr.mxu0 0.0
        %684 = vmatpush1.xpose.msra.mxu0 0.0
        %685 = vmatprep.subr.mxu0 0.0
        %686 = vmatpush1.xpose.msra.mxu0 0.0
        %687 = vmatprep.subr.mxu0 0.0
        %688 = vmatpush1.xpose.msra.mxu0 0.0
        %689 = vmatprep.subr.mxu0 0.0
        %690 = vmatpush1.xpose.msra.mxu0 %v657
        %691 = vmatprep.subr.mxu0 0.0
        %692 = vmatpush2.xpose.msra.mxu0 0.0
        %693 = vmatprep.subr.mxu0 0.0
        %694 = vmatpush2.xpose.msra.mxu0 0.0
        %695 = vmatprep.subr.mxu0 0.0
        %696 = vmatpush2.xpose.msra.mxu0 0.0
        %697 = vmatprep.subr.mxu0 0.0
        %698 = vmatpush2.xpose.msra.mxu0 0.0
        %699 = vmatprep.subr.mxu0 0.0
        %700 = vmatpush2.xpose.msra.mxu0 0.0
        %701 = vmatprep.subr.mxu0 0.0
        %702 = vmatpush2.xpose.msra.mxu0 0.0
        %703 = vmatprep.subr.mxu0 0.0
        %704 = vmatpush2.xpose.msra.mxu0 0.0
        %705 = vmatprep.subr.mxu0 0.0
        %706 = vmatpush2.xpose.msra.mxu0 0.0
        %707 = vmatprep.subr.mxu0 0.0
        %708 = vmatpush2.xpose.msra.mxu0 0.0
        %709 = vmatprep.subr.mxu0 0.0
        %710 = vmatpush2.xpose.msra.mxu0 0.0
        %711 = vmatprep.subr.mxu0 0.0
        %712 = vmatpush2.xpose.msra.mxu0 0.0
        %713 = vmatprep.subr.mxu0 0.0
        %714 = vmatpush2.xpose.msra.mxu0 0.0
        %715 = vmatprep.subr.mxu0 0.0
        %716 = vmatpush2.xpose.msra.mxu0 0.0
        %717 = vmatprep.subr.mxu0 0.0
        %718 = vmatpush2.xpose.msra.mxu0 0.0
        %719 = vmatprep.subr.mxu0 0.0
        %720 = vmatpush2.xpose.msra.mxu0 0.0
        %721 = vmatprep.subr.mxu0 0.0
        %722 = vmatpush2.xpose.msra.mxu0 0.0
        %723 = vmatprep.mubr.f32.mxu0 0.0
        %724 = vmatmul.mubr.f32.gmra.mxu0 %v655
        %v725 = vpop.f32.mrf.mxu0
        %v726 = vadd.f32 0.0, %v725
        %v727 = vpop.f32.mrf.mxu0
        %728 = vdwg.mxu0
        %v729 = vmul.f32 %v726, 0.35355338
        %v730 = vadd.f32 %v729, %v561
        %v731 = vsel %vm481, %v730, -inf
        %732 = vmax.xlane.f32.xlu0 %v731
        %v733 = vpop.xlane.xlu0 %732
        %v734 = vsub.f32 %v730, %v733
        %v735 = vmul.f32 %v734, 1.442695
        %v736 = vpow.pop %v735
        %v737 = vsel %vm481, %v736, 0.0
        %738 = vadd.xlane.f32.xlu0 %v737
        %v739 = vpop.xlane.xlu0 %738
        %v740 = vrcp.pop %v739
        %v741 = vmul.f32 %v736, %v740
        %742 = vrot.lane.b32.xlu0 %v475, 56
        %v743 = vpop.permute.xlu0 %742
        %v746 = vsel %vm481, %v741, 0
        %748 = vmatprep.subr.mxu0 0.0
        %749 = vmatpush1.msra.mxu0 0.0
        %750 = vmatprep.subr.mxu0 0.0
        %751 = vmatpush1.msra.mxu0 0.0
        %752 = vmatprep.subr.mxu0 0.0
        %753 = vmatpush1.msra.mxu0 0.0
        %754 = vmatprep.subr.mxu0 0.0
        %755 = vmatpush1.msra.mxu0 0.0
        %756 = vmatprep.subr.mxu0 0.0
        %757 = vmatpush1.msra.mxu0 0.0
        %758 = vmatprep.subr.mxu0 0.0
        %759 = vmatpush1.msra.mxu0 0.0
        %760 = vmatprep.subr.mxu0 0.0
        %761 = vmatpush1.msra.mxu0 0.0
        %762 = vmatprep.subr.mxu0 0.0
        %763 = vmatpush1.msra.mxu0 0.0
        %764 = vmatprep.subr.mxu0 0.0
        %765 = vmatpush1.msra.mxu0 0.0
        %766 = vmatprep.subr.mxu0 0.0
        %767 = vmatpush1.msra.mxu0 0.0
        %768 = vmatprep.subr.mxu0 0.0
        %769 = vmatpush1.msra.mxu0 0.0
        %770 = vmatprep.subr.mxu0 0.0
        %771 = vmatpush1.msra.mxu0 0.0
        %772 = vmatprep.subr.mxu0 0.0
        %773 = vmatpush1.msra.mxu0 0.0
        %774 = vmatprep.subr.mxu0 0.0
        %775 = vmatpush1.msra.mxu0 0.0
        %776 = vmatprep.subr.mxu0 0.0
        %777 = vmatpush1.msra.mxu0 0.0
        %778 = vmatprep.subr.mxu0 0.0
        %779 = vmatpush1.msra.mxu0 %v743
        %780 = vmatprep.subr.mxu0 0.0
        %781 = vmatpush2.msra.mxu0 0.0
        %782 = vmatprep.subr.mxu0 0.0
        %783 = vmatpush2.msra.mxu0 0.0
        %784 = vmatprep.subr.mxu0 0.0
        %785 = vmatpush2.msra.mxu0 0.0
        %786 = vmatprep.subr.mxu0 0.0
        %787 = vmatpush2.msra.mxu0 0.0
        %788 = vmatprep.subr.mxu0 0.0
        %789 = vmatpush2.msra.mxu0 0.0
        %790 = vmatprep.subr.mxu0 0.0
        %791 = vmatpush2.msra.mxu0 0.0
        %792 = vmatprep.subr.mxu0 0.0
        %793 = vmatpush2.msra.mxu0 0.0
        %794 = vmatprep.subr.mxu0 0.0
        %795 = vmatpush2.msra.mxu0 0.0
        %796 = vmatprep.subr.mxu0 0.0
        %797 = vmatpush2.msra.mxu0 0.0
        %798 = vmatprep.subr.mxu0 0.0
        %799 = vmatpush2.msra.mxu0 0.0
        %800 = vmatprep.subr.mxu0 0.0
        %801 = vmatpush2.msra.mxu0 0.0
        %802 = vmatprep.subr.mxu0 0.0
        %803 = vmatpush2.msra.mxu0 0.0
        %804 = vmatprep.subr.mxu0 0.0
        %805 = vmatpush2.msra.mxu0 0.0
        %806 = vmatprep.subr.mxu0 0.0
        %807 = vmatpush2.msra.mxu0 0.0
        %808 = vmatprep.subr.mxu0 0.0
        %809 = vmatpush2.msra.mxu0 0.0
        %810 = vmatprep.subr.mxu0 0.0
        %811 = vmatpush2.msra.mxu0 0.0
        %812 = vmatprep.mubr.f32.mxu0 0.0
        %813 = vmatmul.mubr.f32.gmra.mxu0 %v746
        %v814 = vpop.f32.mrf.mxu0
        %v815 = vadd.f32 0.0, %v814
        %v816 = vpop.f32.mrf.mxu0
        %817 = vdwg.mxu0
        %818 = vrot.lane.b32.xlu0 %v475, 112
        %v819 = vpop.permute.xlu0 %818
        %820 = vrot.lane.b32.xlu0 %v475, 80
        %v821 = vpop.permute.xlu0 %820
        %v822 = vsel %vm481, %v819, 0
        %v824 = vsel %vm481, %v821, 0
        %826 = vmatprep.subr.mxu0 0.0
        %827 = vmatpush1.xpose.msra.mxu0 0.0
        %828 = vmatprep.subr.mxu0 0.0
        %829 = vmatpush1.xpose.msra.mxu0 0.0
        %830 = vmatprep.subr.mxu0 0.0
        %831 = vmatpush1.xpose.msra.mxu0 0.0
        %832 = vmatprep.subr.mxu0 0.0
        %833 = vmatpush1.xpose.msra.mxu0 0.0
        %834 = vmatprep.subr.mxu0 0.0
        %835 = vmatpush1.xpose.msra.mxu0 0.0
        %836 = vmatprep.subr.mxu0 0.0
        %837 = vmatpush1.xpose.msra.mxu0 0.0
        %838 = vmatprep.subr.mxu0 0.0
        %839 = vmatpush1.xpose.msra.mxu0 0.0
        %840 = vmatprep.subr.mxu0 0.0
        %841 = vmatpush1.xpose.msra.mxu0 0.0
        %842 = vmatprep.subr.mxu0 0.0
        %843 = vmatpush1.xpose.msra.mxu0 0.0
        %844 = vmatprep.subr.mxu0 0.0
        %845 = vmatpush1.xpose.msra.mxu0 0.0
        %846 = vmatprep.subr.mxu0 0.0
        %847 = vmatpush1.xpose.msra.mxu0 0.0
        %848 = vmatprep.subr.mxu0 0.0
        %849 = vmatpush1.xpose.msra.mxu0 0.0
        %850 = vmatprep.subr.mxu0 0.0
        %851 = vmatpush1.xpose.msra.mxu0 0.0
        %852 = vmatprep.subr.mxu0 0.0
        %853 = vmatpush1.xpose.msra.mxu0 0.0
        %854 = vmatprep.subr.mxu0 0.0
        %855 = vmatpush1.xpose.msra.mxu0 0.0
        %856 = vmatprep.subr.mxu0 0.0
        %857 = vmatpush1.xpose.msra.mxu0 %v824
        %858 = vmatprep.subr.mxu0 0.0
        %859 = vmatpush2.xpose.msra.mxu0 0.0
        %860 = vmatprep.subr.mxu0 0.0
        %861 = vmatpush2.xpose.msra.mxu0 0.0
        %862 = vmatprep.subr.mxu0 0.0
        %863 = vmatpush2.xpose.msra.mxu0 0.0
        %864 = vmatprep.subr.mxu0 0.0
        %865 = vmatpush2.xpose.msra.mxu0 0.0
        %866 = vmatprep.subr.mxu0 0.0
        %867 = vmatpush2.xpose.msra.mxu0 0.0
        %868 = vmatprep.subr.mxu0 0.0
        %869 = vmatpush2.xpose.msra.mxu0 0.0
        %870 = vmatprep.subr.mxu0 0.0
        %871 = vmatpush2.xpose.msra.mxu0 0.0
        %872 = vmatprep.subr.mxu0 0.0
        %873 = vmatpush2.xpose.msra.mxu0 0.0
        %874 = vmatprep.subr.mxu0 0.0
        %875 = vmatpush2.xpose.msra.mxu0 0.0
        %876 = vmatprep.subr.mxu0 0.0
        %877 = vmatpush2.xpose.msra.mxu0 0.0
        %878 = vmatprep.subr.mxu0 0.0
        %879 = vmatpush2.xpose.msra.mxu0 0.0
        %880 = vmatprep.subr.mxu0 0.0
        %881 = vmatpush2.xpose.msra.mxu0 0.0
        %882 = vmatprep.subr.mxu0 0.0
        %883 = vmatpush2.xpose.msra.mxu0 0.0
        %884 = vmatprep.subr.mxu0 0.0
        %885 = vmatpush2.xpose.msra.mxu0 0.0
        %886 = vmatprep.subr.mxu0 0.0
        %887 = vmatpush2.xpose.msra.mxu0 0.0
        %888 = vmatprep.subr.mxu0 0.0
        %889 = vmatpush2.xpose.msra.mxu0 0.0
        %890 = vmatprep.mubr.f32.mxu0 0.0
        %891 = vmatmul.mubr.f32.gmra.mxu0 %v822
        %v892 = vpop.f32.mrf.mxu0
        %v893 = vadd.f32 0.0, %v892
        %v894 = vpop.f32.mrf.mxu0
        %895 = vdwg.mxu0
        %v896 = vmul.f32 %v893, 0.35355338
        %v897 = vadd.f32 %v896, %v561
        %v898 = vsel %vm481, %v897, -inf
        %899 = vmax.xlane.f32.xlu0 %v898
        %v900 = vpop.xlane.xlu0 %899
        %v901 = vsub.f32 %v897, %v900
        %v902 = vmul.f32 %v901, 1.442695
        %v903 = vpow.pop %v902
        %v904 = vsel %vm481, %v903, 0.0
        %905 = vadd.xlane.f32.xlu0 %v904
        %v906 = vpop.xlane.xlu0 %905
        %v907 = vrcp.pop %v906
        %v908 = vmul.f32 %v903, %v907
        %909 = vrot.lane.b32.xlu0 %v475, 48
        %v910 = vpop.permute.xlu0 %909
        %v913 = vsel %vm481, %v908, 0
        %915 = vmatprep.subr.mxu0 0.0
        %916 = vmatpush1.msra.mxu0 0.0
        %917 = vmatprep.subr.mxu0 0.0
        %918 = vmatpush1.msra.mxu0 0.0
        %919 = vmatprep.subr.mxu0 0.0
        %920 = vmatpush1.msra.mxu0 0.0
        %921 = vmatprep.subr.mxu0 0.0
        %922 = vmatpush1.msra.mxu0 0.0
        %923 = vmatprep.subr.mxu0 0.0
        %924 = vmatpush1.msra.mxu0 0.0
        %925 = vmatprep.subr.mxu0 0.0
        %926 = vmatpush1.msra.mxu0 0.0
        %927 = vmatprep.subr.mxu0 0.0
        %928 = vmatpush1.msra.mxu0 0.0
        %929 = vmatprep.subr.mxu0 0.0
        %930 = vmatpush1.msra.mxu0 0.0
        %931 = vmatprep.subr.mxu0 0.0
        %932 = vmatpush1.msra.mxu0 0.0
        %933 = vmatprep.subr.mxu0 0.0
        %934 = vmatpush1.msra.mxu0 0.0
        %935 = vmatprep.subr.mxu0 0.0
        %936 = vmatpush1.msra.mxu0 0.0
        %937 = vmatprep.subr.mxu0 0.0
        %938 = vmatpush1.msra.mxu0 0.0
        %939 = vmatprep.subr.mxu0 0.0
        %940 = vmatpush1.msra.mxu0 0.0
        %941 = vmatprep.subr.mxu0 0.0
        %942 = vmatpush1.msra.mxu0 0.0
        %943 = vmatprep.subr.mxu0 0.0
        %944 = vmatpush1.msra.mxu0 0.0
        %945 = vmatprep.subr.mxu0 0.0
        %946 = vmatpush1.msra.mxu0 %v910
        %947 = vmatprep.subr.mxu0 0.0
        %948 = vmatpush2.msra.mxu0 0.0
        %949 = vmatprep.subr.mxu0 0.0
        %950 = vmatpush2.msra.mxu0 0.0
        %951 = vmatprep.subr.mxu0 0.0
        %952 = vmatpush2.msra.mxu0 0.0
        %953 = vmatprep.subr.mxu0 0.0
        %954 = vmatpush2.msra.mxu0 0.0
        %955 = vmatprep.subr.mxu0 0.0
        %956 = vmatpush2.msra.mxu0 0.0
        %957 = vmatprep.subr.mxu0 0.0
        %958 = vmatpush2.msra.mxu0 0.0
        %959 = vmatprep.subr.mxu0 0.0
        %960 = vmatpush2.msra.mxu0 0.0
        %961 = vmatprep.subr.mxu0 0.0
        %962 = vmatpush2.msra.mxu0 0.0
        %963 = vmatprep.subr.mxu0 0.0
        %964 = vmatpush2.msra.mxu0 0.0
        %965 = vmatprep.subr.mxu0 0.0
        %966 = vmatpush2.msra.mxu0 0.0
        %967 = vmatprep.subr.mxu0 0.0
        %968 = vmatpush2.msra.mxu0 0.0
        %969 = vmatprep.subr.mxu0 0.0
        %970 = vmatpush2.msra.mxu0 0.0
        %971 = vmatprep.subr.mxu0 0.0
        %972 = vmatpush2.msra.mxu0 0.0
        %973 = vmatprep.subr.mxu0 0.0
        %974 = vmatpush2.msra.mxu0 0.0
        %975 = vmatprep.subr.mxu0 0.0
        %976 = vmatpush2.msra.mxu0 0.0
        %977 = vmatprep.subr.mxu0 0.0
        %978 = vmatpush2.msra.mxu0 0.0
        %979 = vmatprep.mubr.f32.mxu0 0.0
        %980 = vmatmul.mubr.f32.gmra.mxu0 %v913
        %v981 = vpop.f32.mrf.mxu0
        %v982 = vadd.f32 0.0, %v981
        %v983 = vpop.f32.mrf.mxu0
        %984 = vdwg.mxu0
        %985 = vrot.lane.b32.xlu0 %v475, 104
        %v986 = vpop.permute.xlu0 %985
        %987 = vrot.lane.b32.xlu0 %v475, 72
        %v988 = vpop.permute.xlu0 %987
        %v989 = vsel %vm481, %v986, 0
        %v991 = vsel %vm481, %v988, 0
        %993 = vmatprep.subr.mxu0 0.0
        %994 = vmatpush1.xpose.msra.mxu0 0.0
        %995 = vmatprep.subr.mxu0 0.0
        %996 = vmatpush1.xpose.msra.mxu0 0.0
        %997 = vmatprep.subr.mxu0 0.0
        %998 = vmatpush1.xpose.msra.mxu0 0.0
        %999 = vmatprep.subr.mxu0 0.0
        %1000 = vmatpush1.xpose.msra.mxu0 0.0
        %1001 = vmatprep.subr.mxu0 0.0
        %1002 = vmatpush1.xpose.msra.mxu0 0.0
        %1003 = vmatprep.subr.mxu0 0.0
        %1004 = vmatpush1.xpose.msra.mxu0 0.0
        %1005 = vmatprep.subr.mxu0 0.0
        %1006 = vmatpush1.xpose.msra.mxu0 0.0
        %1007 = vmatprep.subr.mxu0 0.0
        %1008 = vmatpush1.xpose.msra.mxu0 0.0
        %1009 = vmatprep.subr.mxu0 0.0
        %1010 = vmatpush1.xpose.msra.mxu0 0.0
        %1011 = vmatprep.subr.mxu0 0.0
        %1012 = vmatpush1.xpose.msra.mxu0 0.0
        %1013 = vmatprep.subr.mxu0 0.0
        %1014 = vmatpush1.xpose.msra.mxu0 0.0
        %1015 = vmatprep.subr.mxu0 0.0
        %1016 = vmatpush1.xpose.msra.mxu0 0.0
        %1017 = vmatprep.subr.mxu0 0.0
        %1018 = vmatpush1.xpose.msra.mxu0 0.0
        %1019 = vmatprep.subr.mxu0 0.0
        %1020 = vmatpush1.xpose.msra.mxu0 0.0
        %1021 = vmatprep.subr.mxu0 0.0
        %1022 = vmatpush1.xpose.msra.mxu0 0.0
        %1023 = vmatprep.subr.mxu0 0.0
        %1024 = vmatpush1.xpose.msra.mxu0 %v991
        %1025 = vmatprep.subr.mxu0 0.0
        %1026 = vmatpush2.xpose.msra.mxu0 0.0
        %1027 = vmatprep.subr.mxu0 0.0
        %1028 = vmatpush2.xpose.msra.mxu0 0.0
        %1029 = vmatprep.subr.mxu0 0.0
        %1030 = vmatpush2.xpose.msra.mxu0 0.0
        %1031 = vmatprep.subr.mxu0 0.0
        %1032 = vmatpush2.xpose.msra.mxu0 0.0
        %1033 = vmatprep.subr.mxu0 0.0
        %1034 = vmatpush2.xpose.msra.mxu0 0.0
        %1035 = vmatprep.subr.mxu0 0.0
        %1036 = vmatpush2.xpose.msra.mxu0 0.0
        %1037 = vmatprep.subr.mxu0 0.0
        %1038 = vmatpush2.xpose.msra.mxu0 0.0
        %1039 = vmatprep.subr.mxu0 0.0
        %1040 = vmatpush2.xpose.msra.mxu0 0.0
        %1041 = vmatprep.subr.mxu0 0.0
        %1042 = vmatpush2.xpose.msra.mxu0 0.0
        %1043 = vmatprep.subr.mxu0 0.0
        %1044 = vmatpush2.xpose.msra.mxu0 0.0
        %1045 = vmatprep.subr.mxu0 0.0
        %1046 = vmatpush2.xpose.msra.mxu0 0.0
        %1047 = vmatprep.subr.mxu0 0.0
        %1048 = vmatpush2.xpose.msra.mxu0 0.0
        %1049 = vmatprep.subr.mxu0 0.0
        %1050 = vmatpush2.xpose.msra.mxu0 0.0
        %1051 = vmatprep.subr.mxu0 0.0
        %1052 = vmatpush2.xpose.msra.mxu0 0.0
        %1053 = vmatprep.subr.mxu0 0.0
        %1054 = vmatpush2.xpose.msra.mxu0 0.0
        %1055 = vmatprep.subr.mxu0 0.0
        %1056 = vmatpush2.xpose.msra.mxu0 0.0
        %1057 = vmatprep.mubr.f32.mxu0 0.0
        %1058 = vmatmul.mubr.f32.gmra.mxu0 %v989
        %v1059 = vpop.f32.mrf.mxu0
        %v1060 = vadd.f32 0.0, %v1059
        %v1061 = vpop.f32.mrf.mxu0
        %1062 = vdwg.mxu0
        %v1063 = vmul.f32 %v1060, 0.35355338
        %v1064 = vadd.f32 %v1063, %v561
        %v1065 = vsel %vm481, %v1064, -inf
        %1066 = vmax.xlane.f32.xlu0 %v1065
        %v1067 = vpop.xlane.xlu0 %1066
        %v1068 = vsub.f32 %v1064, %v1067
        %v1069 = vmul.f32 %v1068, 1.442695
        %v1070 = vpow.pop %v1069
        %v1071 = vsel %vm481, %v1070, 0.0
        %1072 = vadd.xlane.f32.xlu0 %v1071
        %v1073 = vpop.xlane.xlu0 %1072
        %v1074 = vrcp.pop %v1073
        %v1075 = vmul.f32 %v1070, %v1074
        %1076 = vrot.lane.b32.xlu0 %v475, 40
        %v1077 = vpop.permute.xlu0 %1076
        %v1080 = vsel %vm481, %v1075, 0
        %1082 = vmatprep.subr.mxu0 0.0
        %1083 = vmatpush1.msra.mxu0 0.0
        %1084 = vmatprep.subr.mxu0 0.0
        %1085 = vmatpush1.msra.mxu0 0.0
        %1086 = vmatprep.subr.mxu0 0.0
        %1087 = vmatpush1.msra.mxu0 0.0
        %1088 = vmatprep.subr.mxu0 0.0
        %1089 = vmatpush1.msra.mxu0 0.0
        %1090 = vmatprep.subr.mxu0 0.0
        %1091 = vmatpush1.msra.mxu0 0.0
        %1092 = vmatprep.subr.mxu0 0.0
        %1093 = vmatpush1.msra.mxu0 0.0
        %1094 = vmatprep.subr.mxu0 0.0
        %1095 = vmatpush1.msra.mxu0 0.0
        %1096 = vmatprep.subr.mxu0 0.0
        %1097 = vmatpush1.msra.mxu0 0.0
        %1098 = vmatprep.subr.mxu0 0.0
        %1099 = vmatpush1.msra.mxu0 0.0
        %1100 = vmatprep.subr.mxu0 0.0
        %1101 = vmatpush1.msra.mxu0 0.0
        %1102 = vmatprep.subr.mxu0 0.0
        %1103 = vmatpush1.msra.mxu0 0.0
        %1104 = vmatprep.subr.mxu0 0.0
        %1105 = vmatpush1.msra.mxu0 0.0
        %1106 = vmatprep.subr.mxu0 0.0
        %1107 = vmatpush1.msra.mxu0 0.0
        %1108 = vmatprep.subr.mxu0 0.0
        %1109 = vmatpush1.msra.mxu0 0.0
        %1110 = vmatprep.subr.mxu0 0.0
        %1111 = vmatpush1.msra.mxu0 0.0
        %1112 = vmatprep.subr.mxu0 0.0
        %1113 = vmatpush1.msra.mxu0 %v1077
        %1114 = vmatprep.subr.mxu0 0.0
        %1115 = vmatpush2.msra.mxu0 0.0
        %1116 = vmatprep.subr.mxu0 0.0
        %1117 = vmatpush2.msra.mxu0 0.0
        %1118 = vmatprep.subr.mxu0 0.0
        %1119 = vmatpush2.msra.mxu0 0.0
        %1120 = vmatprep.subr.mxu0 0.0
        %1121 = vmatpush2.msra.mxu0 0.0
        %1122 = vmatprep.subr.mxu0 0.0
        %1123 = vmatpush2.msra.mxu0 0.0
        %1124 = vmatprep.subr.mxu0 0.0
        %1125 = vmatpush2.msra.mxu0 0.0
        %1126 = vmatprep.subr.mxu0 0.0
        %1127 = vmatpush2.msra.mxu0 0.0
        %1128 = vmatprep.subr.mxu0 0.0
        %1129 = vmatpush2.msra.mxu0 0.0
        %1130 = vmatprep.subr.mxu0 0.0
        %1131 = vmatpush2.msra.mxu0 0.0
        %1132 = vmatprep.subr.mxu0 0.0
        %1133 = vmatpush2.msra.mxu0 0.0
        %1134 = vmatprep.subr.mxu0 0.0
        %1135 = vmatpush2.msra.mxu0 0.0
        %1136 = vmatprep.subr.mxu0 0.0
        %1137 = vmatpush2.msra.mxu0 0.0
        %1138 = vmatprep.subr.mxu0 0.0
        %1139 = vmatpush2.msra.mxu0 0.0
        %1140 = vmatprep.subr.mxu0 0.0
        %1141 = vmatpush2.msra.mxu0 0.0
        %1142 = vmatprep.subr.mxu0 0.0
        %1143 = vmatpush2.msra.mxu0 0.0
        %1144 = vmatprep.subr.mxu0 0.0
        %1145 = vmatpush2.msra.mxu0 0.0
        %1146 = vmatprep.mubr.f32.mxu0 0.0
        %1147 = vmatmul.mubr.f32.gmra.mxu0 %v1080
        %v1148 = vpop.f32.mrf.mxu0
        %v1149 = vadd.f32 0.0, %v1148
        %v1150 = vpop.f32.mrf.mxu0
        %1151 = vdwg.mxu0
        %1153 = vrot.lane.b32.xlu0 %v815, 8
        %v1154 = vpop.permute.xlu0 %1153
        %1157 = vrot.lane.b32.xlu0 %v982, 16
        %v1158 = vpop.permute.xlu0 %1157
        %1161 = vrot.lane.b32.xlu0 %v1149, 24
        %v1162 = vpop.permute.xlu0 %1161
        %v1164 = vsel %vm481, %v648, %v1154
        %vm1165 = vcmask 130048
        %v1166 = vsel %vm1165, %v1164, %v1158
        %vm1167 = vcmask 195584
        %v1168 = vsel %vm1167, %v1166, %v1162
        %v1170 = vlaneseq
        %v1171 = vshrl.u32 %v1170, 7
        %v1172 = vsub.s32 0, %v1171
        %v1173 = vrot.slane %v395, %v1172
        %v1176 = vsel %vm404, %v1168, 0
        %1178 = vmatprep.subr.mxu0 0.0
        %1179 = vmatpush1.msra.mxu0 0.0
        %1180 = vmatprep.subr.mxu0 0.0
        %1181 = vmatpush1.msra.mxu0 0.0
        %1182 = vmatprep.subr.mxu0 0.0
        %1183 = vmatpush1.msra.mxu0 0.0
        %1184 = vmatprep.subr.mxu0 0.0
        %1185 = vmatpush1.msra.mxu0 0.0
        %1186 = vmatprep.subr.mxu0 0.0
        %1187 = vmatpush1.msra.mxu0 0.0
        %1188 = vmatprep.subr.mxu0 0.0
        %1189 = vmatpush1.msra.mxu0 0.0
        %1190 = vmatprep.subr.mxu0 0.0
        %1191 = vmatpush1.msra.mxu0 0.0
        %1192 = vmatprep.subr.mxu0 0.0
        %1193 = vmatpush1.msra.mxu0 0.0
        %1194 = vmatprep.subr.mxu0 0.0
        %1195 = vmatpush1.msra.mxu0 0.0
        %1196 = vmatprep.subr.mxu0 0.0
        %1197 = vmatpush1.msra.mxu0 0.0
        %1198 = vmatprep.subr.mxu0 0.0
        %1199 = vmatpush1.msra.mxu0 0.0
        %1200 = vmatprep.subr.mxu0 0.0
        %1201 = vmatpush1.msra.mxu0 0.0
        %1202 = vmatprep.subr.mxu0 0.0
        %1203 = vmatpush1.msra.mxu0 %v394
        %1204 = vmatprep.subr.mxu0 0.0
        %1205 = vmatpush1.msra.mxu0 %v393
        %1206 = vmatprep.subr.mxu0 0.0
        %1207 = vmatpush1.msra.mxu0 %v392
        %1208 = vmatprep.subr.mxu0 0.0
        %1209 = vmatpush1.msra.mxu0 %v391
        %1210 = vmatprep.subr.mxu0 0.0
        %1211 = vmatpush2.msra.mxu0 0.0
        %1212 = vmatprep.subr.mxu0 0.0
        %1213 = vmatpush2.msra.mxu0 0.0
        %1214 = vmatprep.subr.mxu0 0.0
        %1215 = vmatpush2.msra.mxu0 0.0
        %1216 = vmatprep.subr.mxu0 0.0
        %1217 = vmatpush2.msra.mxu0 0.0
        %1218 = vmatprep.subr.mxu0 0.0
        %1219 = vmatpush2.msra.mxu0 0.0
        %1220 = vmatprep.subr.mxu0 0.0
        %1221 = vmatpush2.msra.mxu0 0.0
        %1222 = vmatprep.subr.mxu0 0.0
        %1223 = vmatpush2.msra.mxu0 0.0
        %1224 = vmatprep.subr.mxu0 0.0
        %1225 = vmatpush2.msra.mxu0 0.0
        %1226 = vmatprep.subr.mxu0 0.0
        %1227 = vmatpush2.msra.mxu0 0.0
        %1228 = vmatprep.subr.mxu0 0.0
        %1229 = vmatpush2.msra.mxu0 0.0
        %1230 = vmatprep.subr.mxu0 0.0
        %1231 = vmatpush2.msra.mxu0 0.0
        %1232 = vmatprep.subr.mxu0 0.0
        %1233 = vmatpush2.msra.mxu0 0.0
        %1234 = vmatprep.subr.mxu0 0.0
        %1235 = vmatpush2.msra.mxu0 0.0
        %1236 = vmatprep.subr.mxu0 0.0
        %1237 = vmatpush2.msra.mxu0 0.0
        %1238 = vmatprep.subr.mxu0 0.0
        %1239 = vmatpush2.msra.mxu0 0.0
        %1240 = vmatprep.subr.mxu0 0.0
        %1241 = vmatpush2.msra.mxu0 0.0
        %1242 = vmatprep.mubr.f32.mxu0 0.0
        %1243 = vmatmul.mubr.f32.gmra.mxu0 %v1176
        %v1244 = vpop.f32.mrf.mxu0
        %v1245 = vadd.f32 %v1173, %v1244
        %v1246 = vpop.f32.mrf.mxu0
        %1247 = vdwg.mxu0
        %v1248 = vadd.f32 %v1245, %v384
        %v1249 = vsel %vm404, %v1248, 0.0
        %1250 = vadd.xlane.f32.xlu0 %v1249
        %v1251 = vpop.xlane.xlu0 %1250
        %v1252 = vrcp.pop 32.0
        %v1253 = vmul.f32 %v1251, %v1252
        %v1254 = vsub.f32 %v1248, %v1253
        %v1255 = vmul.f32 %v1254, %v1254
        %v1256 = vsel %vm404, %v1255, 0.0
        %1257 = vadd.xlane.f32.xlu0 %v1256
        %v1258 = vpop.xlane.xlu0 %1257
        %v1259 = vmul.f32 %v1258, %v1252
        %v1260 = vadd.f32 %v1259, 1e-12
        %v1261 = vrsqrt.pop %v1260
        %v1262 = vmul.f32 %v1254, %v1261
        %v1264 = vlaneseq
        %v1265 = vshrl.u32 %v1264, 7
        %v1266 = vsub.s32 0, %v1265
        %v1267 = vrot.slane %v396, %v1266
        %v1269 = vmul.f32 %v1267, %v1262
        %v1271 = vlaneseq
        %v1272 = vshrl.u32 %v1271, 7
        %v1273 = vsub.s32 0, %v1272
        %v1274 = vrot.slane %v397, %v1273
        %v1276 = vadd.f32 %v1269, %v1274
        %1277 = vst.msk [vmem:[%s383] sm:$0xff] %vm404, %v1276
        %s1278 = sand.u32 %s215, 1
        %s1279 = scalar_lea.sflag [#allocation4], %s1278
        %s1280 = sand.u32 %s215, 1
        %s1281 = smul.addr %s1280, 8
        %s1282 = scalar_lea.vmem [#allocation10], %s1281
        // Predicated region
        $region69: #{tpu_custom_call.1} parent=51 // pred_check
          %p1283 = pneg %p225
        $region70: #{tpu_custom_call.1} parent=51 // pred_check_branch
          %1285 = sbr.rel (%p1283) target = $region72
        $region71: #{tpu_custom_call.1} parent=51 // pred_region
          %s1287 = ssub.s32 128, 128
          %1288 = vsyncadd %s1279, %s1287
          %s1289 = smul.addr %s29, 128
          %s1290 = scalar_lea.hbm %s8, %s1289
          %s1292 = sshll.u32 %s1282, 4
          %s1293 = int_to_ptr.vmem [resolvable:$true] %s1292
          %1295 = dma.vmem_to_hbm [thread:$0]  %s1293, 128, %s1290, %s1279
        $region72: #{tpu_custom_call.1} parent=51 // pred_fallthru
          _
      $region52: #{tpu_custom_call.1} parent=5 // pred_fallthru
        _
      %p1296 = scmp.le.s32.totalorder 2, %s24
      // Predicated region
      $region73: #{tpu_custom_call.1} parent=5 // pred_check
        %p1297 = pneg %p1296
      $region74: #{tpu_custom_call.1} parent=5 // pred_check_branch
        %1299 = sbr.rel (%p1297) target = $region76
      $region75: #{tpu_custom_call.1} parent=5 // pred_region
        %s1300 = ssub.s32 %s24, 2
        // Predicated region
        $region77: #{tpu_custom_call.1} parent=75 // pred_check
          %p1301 = pneg %p231
        $region78: #{tpu_custom_call.1} parent=75 // pred_check_branch
          %1303 = sbr.rel (%p1301) target = $region80
        $region79: #{tpu_custom_call.1} parent=75 // pred_region
          %s1304 = sand.u32 %s216, 1
          %s1305 = scalar_lea.sflag [#allocation4], %s1304
          %s1306 = sand.u32 %s216, 1
          %s1307 = smul.addr %s1306, 8
          %s1308 = scalar_lea.vmem [#allocation10], %s1307
          %1309 = dma.done %s1305, 128
        $region80: #{tpu_custom_call.1} parent=75 // pred_fallthru
          _
      $region76: #{tpu_custom_call.1} parent=5 // pred_fallthru
        _
    $region6: #{tpu_custom_call.1} parent=1 // loop_footer
      %s28 = sadd.s32 1, %s24
    $region7: #{tpu_custom_call.1} parent=1 // loop_footer_branch
      %23 = sbr.rel target = $region3
    $region8: #{tpu_custom_call.1} parent=1 // loop_exit
      _
    %1310 = vsyncpa [#allocation3], 1
    %s1311 = scalar_lea.sflag [#allocation3], 1
    %1312 = vsyncpa %s1311, 1
    %1313 = vsyncpa [#allocation6], 1
    %s1314 = scalar_lea.sflag [#allocation6], 1
    %1315 = vsyncpa %s1314, 1
    %1316 = vsyncpa [#allocation9], 1
    %1317 = vsyncpa [#allocation4], 1
    %s1318 = scalar_lea.sflag [#allocation4], 1
    %1319 = vsyncpa %s1318, 1

</llo_original>
